<compile_context>
chip_gen: v7x
topology: tpu7x:2x2x1
jax: 0.10.0
libtpu: 0.0.40
codegen_flags: <defaults>
</compile_context>

<pallas_src>
import jax
import jax.numpy as jnp
import numpy as np
from jax import lax
from jax.experimental import pallas as pl
from jax.experimental.pallas import tpu as pltpu

# kernel-tap index for padded shift d (0 or 1) at output parity r:
#   r=0: shift 0 -> tap 3, shift 1 -> tap 1 ;  r=1: shift 1 -> tap 2, shift 2 -> tap 0
_KTAP = ((3, 1), (2, 0))


def _deconv_bn_relu_kernel(x_ref, w_ref, scale_ref, shift_ref, out_ref):
    # x_ref:     (1, H+2, W+2, Cin)    bf16 zero-padded NHWC input (one image)
    # w_ref:     (1, 2, 4*Cin, Cout)   bf16 fused taps for this row parity (axis 1 = rw)
    # scale_ref: (1, W*Cout)           f32 folded BN scale, tiled W times
    # shift_ref: (1, W*Cout)           f32 folded (bias + BN) shift, tiled W times
    # out_ref:   (1, 1, 2, H, W*Cout)  f32 outputs of the two width-parity phases
    H = out_ref.shape[3]
    WC = out_ref.shape[4]
    Cin = x_ref.shape[3]
    Cout = w_ref.shape[3]
    W = WC // Cout
    K = w_ref.shape[2]            # 4 * Cin

    rh = pl.program_id(1)         # output row parity handled by this grid step
    scale = scale_ref[...]        # (1, W*Cout)
    shift = shift_ref[...]

    # Hoist the 6 distinct shifted windows (2 row shifts x 3 col shifts); both
    # width-parity phases reuse them (was 16 slice+reshape ops, now 2 loads + 6 slices).
    wins = []                     # index dh*3 + sw -> (H, W, Cin)
    for dh in (0, 1):
        rows = x_ref[0, pl.ds(rh + dh, H)]        # (H, W+2, Cin)
        for sw in (0, 1, 2):
            wins.append(rows[:, sw:sw + W, :])

    for rw in (0, 1):
        # one fused MXU matmul per phase: K = 4*Cin, bf16 operands, f32 accumulation
        patch = jnp.concatenate(
            [wins[dh * 3 + rw + dw] for dh in (0, 1) for dw in (0, 1)],
            axis=-1).reshape(H * W, K)                        # (H*W, 4*Cin)
        acc = jnp.dot(patch, w_ref[0, rw],
                      preferred_element_type=jnp.float32)     # (H*W, Cout)
        # relayout to a lane-dense (H, W*Cout) slab so BN/ReLU and the store run at
        # full 128-lane occupancy even when Cout < 128 (built from supported
        # slice + lane-concat ops).
        y3 = acc.reshape(H, W, Cout)
        z = jnp.concatenate([y3[:, p, :] for p in range(W)], axis=-1)   # (H, W*Cout)
        z = jnp.maximum(z * scale + shift, 0.0)
        out_ref[0, 0, rw] = z.astype(out_ref.dtype)


def deconv_module_forward(x_nchw, wt, bias, gamma, beta, running_mean,
                          running_var, eps=1e-5):
    """Forward of DeconvModule (ConvTranspose2d k=4,s=2,p=1 + eval-BN + ReLU).

    x_nchw: (N, Cin, H, W) float32
    wt:     (Cin, Cout, 4, 4) PyTorch ConvTranspose2d weight layout
    returns (N, Cout, 2H, 2W) float32
    """
    N, Cin, H, W = x_nchw.shape
    Cout = wt.shape[1]

    # --- glue (XLA fuses transpose + pad + cast into one pass over the activations) ---
    x_pad = jnp.pad(jnp.transpose(x_nchw, (0, 2, 3, 1)),
                    ((0, 0), (1, 1), (1, 1), (0, 0))).astype(jnp.bfloat16)

    # Fuse the 4 taps of each phase into a single (4*Cin, Cout) matrix -> the kernel
    # runs one K=4*Cin matmul per phase instead of four K=Cin matmuls.
    w_khkw = jnp.transpose(wt, (2, 3, 0, 1))  # (kh, kw, Cin, Cout)
    w_fused = jnp.stack([
        jnp.stack([
            jnp.concatenate([w_khkw[_KTAP[rh][dh], _KTAP[rw][dw]]
                             for dh in (0, 1) for dw in (0, 1)], axis=0)
            for rw in (0, 1)])
        for rh in (0, 1)]).astype(jnp.bfloat16)             # (2, 2, 4*Cin, Cout)

    # Fold conv bias + eval-mode BN into one per-channel affine, tiled W times so it
    # broadcasts directly against the lane-dense (H, W*Cout) tiles inside the kernel.
    inv_std = 1.0 / jnp.sqrt(running_var + eps)
    scale = (gamma * inv_std).reshape(1, Cout)
    shift = ((bias - running_mean) * gamma * inv_std + beta).reshape(1, Cout)
    scale_t = jnp.tile(scale, (1, W))                        # (1, W*Cout)
    shift_t = jnp.tile(shift, (1, W))

    WC = W * Cout
    phases = pl.pallas_call(
        _deconv_bn_relu_kernel,
        out_shape=jax.ShapeDtypeStruct((N, 2, 2, H, WC), jnp.float32),
        grid_spec=pltpu.PrefetchScalarGridSpec(
            num_scalar_prefetch=0,
            grid=(N, 2),   # (batch, output-row parity); both parallel for v7x's 2 TCs
            in_specs=[
                pl.BlockSpec((1, H + 2, W + 2, Cin), lambda n, rh: (n, 0, 0, 0)),
                pl.BlockSpec((1, 2, 4 * Cin, Cout), lambda n, rh: (rh, 0, 0, 0)),
                pl.BlockSpec((1, WC), lambda n, rh: (0, 0)),
                pl.BlockSpec((1, WC), lambda n, rh: (0, 0)),
            ],
            out_specs=pl.BlockSpec((1, 1, 2, H, WC),
                                   lambda n, rh: (n, rh, 0, 0, 0)),
        ),
        compiler_params=pltpu.CompilerParams(
            dimension_semantics=("parallel", "parallel"),
            vmem_limit_bytes=48 * 1024 * 1024),
    )(x_pad, w_fused, scale_t, shift_t)

    # Phase interleave + NHWC->NCHW in a SINGLE transpose (the NCHW conversion was needed
    # anyway, so the interleave costs no extra HBM round trip):
    #   out[n, c, 2q+rh, 2p+rw] = phases[n, rh, rw, q, p, c]
    out = phases.reshape(N, 2, 2, H, W, Cout)
    out = out.transpose(0, 5, 3, 1, 4, 2)                    # (N, Cout, H, 2, W, 2)
    return out.reshape(N, Cout, 2 * H, 2 * W)


def reference_forward(x, wt, bias, gamma, beta, mean, var, eps=1e-5):
    """Pure-JAX f32 reference: ConvTranspose2d(k=4,s=2,p=1) + eval-BN + ReLU in NCHW."""
    k, s, p = 4, 2, 1
    w_conv = jnp.flip(wt, axis=(2, 3)).transpose(1, 0, 2, 3)  # OIHW
    z = lax.conv_general_dilated(
        x, w_conv, window_strides=(1, 1),
        padding=[(k - 1 - p, k - 1 - p)] * 2,
        lhs_dilation=(s, s),
        dimension_numbers=('NCHW', 'OIHW', 'NCHW'))
    z = z + bias.reshape(1, -1, 1, 1)
    y = (gamma.reshape(1, -1, 1, 1) * (z - mean.reshape(1, -1, 1, 1))
         / jnp.sqrt(var.reshape(1, -1, 1, 1) + eps) + beta.reshape(1, -1, 1, 1))
    return jnp.maximum(y, 0.0)


if __name__ == "__main__":
    key = jax.random.PRNGKey(0)
    kx, kw, kb = jax.random.split(key, 3)

    N, Cin, Cout, H, W = 2, 4, 8, 16, 16
    x = jax.random.normal(kx, (N, Cin, H, W), jnp.float32)
    # ConvTranspose2d weight layout: (in_channels, out_channels, kH, kW)
    wt = 0.1 * jax.random.normal(kw, (Cin, Cout, 4, 4), jnp.float32)
    bias = 0.1 * jax.random.normal(kb, (Cout,), jnp.float32)
    # deterministic, non-trivial BN parameters (eval mode / running stats)
    gamma = 1.0 + 0.1 * jnp.arange(Cout, dtype=jnp.float32)
    beta = 0.05 * jnp.arange(Cout, dtype=jnp.float32)
    running_mean = 0.02 * jnp.arange(Cout, dtype=jnp.float32)
    running_var = 1.0 + 0.01 * jnp.arange(Cout, dtype=jnp.float32)

    out = deconv_module_forward(x, wt, bias, gamma, beta,
                                running_mean, running_var)
    out = jax.block_until_ready(out)

    ref = reference_forward(x, wt, bias, gamma, beta,
                            running_mean, running_var)
    assert out.shape == (N, Cout, 2 * H, 2 * W), out.shape
    # tolerance loosened vs the f32 reference because matmul operands are bf16
    np.testing.assert_allclose(np.asarray(out), np.asarray(ref),
                               atol=3e-2, rtol=3e-2)
    print("KERNEL_OK")
</pallas_src>

<mosaic_0001>
module attributes {stable_mosaic.version = 11 : i64} {
  func.func @_deconv_bn_relu_kernel(%arg0: i32, %arg1: i32, %arg2: memref<1x18x18x4xbf16, #tpu.memory_space<vmem>>, %arg3: memref<1x2x16x8xbf16, #tpu.memory_space<vmem>>, %arg4: memref<1x128xf32, #tpu.memory_space<vmem>>, %arg5: memref<1x128xf32, #tpu.memory_space<vmem>>, %arg6: memref<1x1x2x16x128xf32, #tpu.memory_space<vmem>>) attributes {dimension_semantics = [#tpu.dimension_semantics<parallel>, #tpu.dimension_semantics<parallel>], iteration_bounds = array<i64: 2, 2>, scalar_prefetch = 0 : i64, scratch_operands = 0 : i64, tpu.core_type = #tpu.core_type<tc>, window_params = [{transform_indices = @transform_0, window_bounds = array<i64: 1, 18, 18, 4>}, {transform_indices = @transform_1, window_bounds = array<i64: 1, 2, 16, 8>}, {pipeline_mode = #tpu.pipeline_mode<synchronous>, transform_indices = @transform_2, window_bounds = array<i64: 1, 128>}, {pipeline_mode = #tpu.pipeline_mode<synchronous>, transform_indices = @transform_3, window_bounds = array<i64: 1, 128>}, {transform_indices = @transform_4, window_bounds = array<i64: 1, 1, 2, 16, 128>}]} {
    %c0 = arith.constant 0 : index
    %c0_0 = arith.constant 0 : index
    %0 = vector.load %arg4[%c0, %c0_0] : memref<1x128xf32, #tpu.memory_space<vmem>>, vector<1x128xf32>
    %c0_1 = arith.constant 0 : index
    %c0_2 = arith.constant 0 : index
    %1 = vector.load %arg5[%c0_1, %c0_2] : memref<1x128xf32, #tpu.memory_space<vmem>>, vector<1x128xf32>
    %c0_i32 = arith.constant 0 : i32
    %2 = arith.addi %arg1, %c0_i32 : i32
    %c0_3 = arith.constant 0 : index
    %3 = arith.index_cast %2 : i32 to index
    %c0_4 = arith.constant 0 : index
    %c0_5 = arith.constant 0 : index
    %4 = vector.load %arg2[%c0_3, %3, %c0_4, %c0_5] : memref<1x18x18x4xbf16, #tpu.memory_space<vmem>>, vector<1x16x18x4xbf16>
    %5 = vector.shape_cast %4 : vector<1x16x18x4xbf16> to vector<16x18x4xbf16>
    %6 = vector.extract_strided_slice %5 {offsets = [0, 0, 0], sizes = [16, 16, 4], strides = [1, 1, 1]} : vector<16x18x4xbf16> to vector<16x16x4xbf16>
    %7 = vector.extract_strided_slice %5 {offsets = [0, 1, 0], sizes = [16, 16, 4], strides = [1, 1, 1]} : vector<16x18x4xbf16> to vector<16x16x4xbf16>
    %8 = vector.extract_strided_slice %5 {offsets = [0, 2, 0], sizes = [16, 16, 4], strides = [1, 1, 1]} : vector<16x18x4xbf16> to vector<16x16x4xbf16>
    %c1_i32 = arith.constant 1 : i32
    %9 = arith.addi %arg1, %c1_i32 : i32
    %c0_6 = arith.constant 0 : index
    %10 = arith.index_cast %9 : i32 to index
    %c0_7 = arith.constant 0 : index
    %c0_8 = arith.constant 0 : index
    %11 = vector.load %arg2[%c0_6, %10, %c0_7, %c0_8] : memref<1x18x18x4xbf16, #tpu.memory_space<vmem>>, vector<1x16x18x4xbf16>
    %12 = vector.shape_cast %11 : vector<1x16x18x4xbf16> to vector<16x18x4xbf16>
    %13 = vector.extract_strided_slice %12 {offsets = [0, 0, 0], sizes = [16, 16, 4], strides = [1, 1, 1]} : vector<16x18x4xbf16> to vector<16x16x4xbf16>
    %14 = vector.extract_strided_slice %12 {offsets = [0, 1, 0], sizes = [16, 16, 4], strides = [1, 1, 1]} : vector<16x18x4xbf16> to vector<16x16x4xbf16>
    %15 = vector.extract_strided_slice %12 {offsets = [0, 2, 0], sizes = [16, 16, 4], strides = [1, 1, 1]} : vector<16x18x4xbf16> to vector<16x16x4xbf16>
    %16 = tpu.concatenate %6, %7, %13, %14 in 2 : vector<16x16x4xbf16>, vector<16x16x4xbf16>, vector<16x16x4xbf16>, vector<16x16x4xbf16> -> vector<16x16x16xbf16>
    %17 = vector.shape_cast %16 : vector<16x16x16xbf16> to vector<256x16xbf16>
    %c0_9 = arith.constant 0 : index
    %c0_10 = arith.constant 0 : index
    %c0_11 = arith.constant 0 : index
    %c0_12 = arith.constant 0 : index
    %18 = vector.load %arg3[%c0_9, %c0_10, %c0_11, %c0_12] : memref<1x2x16x8xbf16, #tpu.memory_space<vmem>>, vector<1x1x16x8xbf16>
    %19 = vector.shape_cast %18 : vector<1x1x16x8xbf16> to vector<16x8xbf16>
    %cst = arith.constant dense<0.000000e+00> : vector<256x8xf32>
    %20 = tpu.matmul %17, %19, %cst {dimension_numbers = #tpu.dot_dimension_numbers<[1], [0], [0], [1], [0, 0, 1, 1], [], []>} : vector<256x16xbf16>, vector<16x8xbf16>, vector<256x8xf32> -> vector<256x8xf32>
    %21 = vector.shape_cast %20 : vector<256x8xf32> to vector<16x16x8xf32>
    %22 = vector.extract_strided_slice %21 {offsets = [0, 0, 0], sizes = [16, 1, 8], strides = [1, 1, 1]} : vector<16x16x8xf32> to vector<16x1x8xf32>
    %23 = vector.shape_cast %22 : vector<16x1x8xf32> to vector<16x8xf32>
    %24 = vector.extract_strided_slice %21 {offsets = [0, 1, 0], sizes = [16, 1, 8], strides = [1, 1, 1]} : vector<16x16x8xf32> to vector<16x1x8xf32>
    %25 = vector.shape_cast %24 : vector<16x1x8xf32> to vector<16x8xf32>
    %26 = vector.extract_strided_slice %21 {offsets = [0, 2, 0], sizes = [16, 1, 8], strides = [1, 1, 1]} : vector<16x16x8xf32> to vector<16x1x8xf32>
    %27 = vector.shape_cast %26 : vector<16x1x8xf32> to vector<16x8xf32>
    %28 = vector.extract_strided_slice %21 {offsets = [0, 3, 0], sizes = [16, 1, 8], strides = [1, 1, 1]} : vector<16x16x8xf32> to vector<16x1x8xf32>
    %29 = vector.shape_cast %28 : vector<16x1x8xf32> to vector<16x8xf32>
    %30 = vector.extract_strided_slice %21 {offsets = [0, 4, 0], sizes = [16, 1, 8], strides = [1, 1, 1]} : vector<16x16x8xf32> to vector<16x1x8xf32>
    %31 = vector.shape_cast %30 : vector<16x1x8xf32> to vector<16x8xf32>
    %32 = vector.extract_strided_slice %21 {offsets = [0, 5, 0], sizes = [16, 1, 8], strides = [1, 1, 1]} : vector<16x16x8xf32> to vector<16x1x8xf32>
    %33 = vector.shape_cast %32 : vector<16x1x8xf32> to vector<16x8xf32>
    %34 = vector.extract_strided_slice %21 {offsets = [0, 6, 0], sizes = [16, 1, 8], strides = [1, 1, 1]} : vector<16x16x8xf32> to vector<16x1x8xf32>
    %35 = vector.shape_cast %34 : vector<16x1x8xf32> to vector<16x8xf32>
    %36 = vector.extract_strided_slice %21 {offsets = [0, 7, 0], sizes = [16, 1, 8], strides = [1, 1, 1]} : vector<16x16x8xf32> to vector<16x1x8xf32>
    %37 = vector.shape_cast %36 : vector<16x1x8xf32> to vector<16x8xf32>
    %38 = vector.extract_strided_slice %21 {offsets = [0, 8, 0], sizes = [16, 1, 8], strides = [1, 1, 1]} : vector<16x16x8xf32> to vector<16x1x8xf32>
    %39 = vector.shape_cast %38 : vector<16x1x8xf32> to vector<16x8xf32>
    %40 = vector.extract_strided_slice %21 {offsets = [0, 9, 0], sizes = [16, 1, 8], strides = [1, 1, 1]} : vector<16x16x8xf32> to vector<16x1x8xf32>
    %41 = vector.shape_cast %40 : vector<16x1x8xf32> to vector<16x8xf32>
    %42 = vector.extract_strided_slice %21 {offsets = [0, 10, 0], sizes = [16, 1, 8], strides = [1, 1, 1]} : vector<16x16x8xf32> to vector<16x1x8xf32>
    %43 = vector.shape_cast %42 : vector<16x1x8xf32> to vector<16x8xf32>
    %44 = vector.extract_strided_slice %21 {offsets = [0, 11, 0], sizes = [16, 1, 8], strides = [1, 1, 1]} : vector<16x16x8xf32> to vector<16x1x8xf32>
    %45 = vector.shape_cast %44 : vector<16x1x8xf32> to vector<16x8xf32>
    %46 = vector.extract_strided_slice %21 {offsets = [0, 12, 0], sizes = [16, 1, 8], strides = [1, 1, 1]} : vector<16x16x8xf32> to vector<16x1x8xf32>
    %47 = vector.shape_cast %46 : vector<16x1x8xf32> to vector<16x8xf32>
    %48 = vector.extract_strided_slice %21 {offsets = [0, 13, 0], sizes = [16, 1, 8], strides = [1, 1, 1]} : vector<16x16x8xf32> to vector<16x1x8xf32>
    %49 = vector.shape_cast %48 : vector<16x1x8xf32> to vector<16x8xf32>
    %50 = vector.extract_strided_slice %21 {offsets = [0, 14, 0], sizes = [16, 1, 8], strides = [1, 1, 1]} : vector<16x16x8xf32> to vector<16x1x8xf32>
    %51 = vector.shape_cast %50 : vector<16x1x8xf32> to vector<16x8xf32>
    %52 = vector.extract_strided_slice %21 {offsets = [0, 15, 0], sizes = [16, 1, 8], strides = [1, 1, 1]} : vector<16x16x8xf32> to vector<16x1x8xf32>
    %53 = vector.shape_cast %52 : vector<16x1x8xf32> to vector<16x8xf32>
    %54 = tpu.concatenate %23, %25, %27, %29, %31, %33, %35, %37, %39, %41, %43, %45, %47, %49, %51, %53 in 1 : vector<16x8xf32>, vector<16x8xf32>, vector<16x8xf32>, vector<16x8xf32>, vector<16x8xf32>, vector<16x8xf32>, vector<16x8xf32>, vector<16x8xf32>, vector<16x8xf32>, vector<16x8xf32>, vector<16x8xf32>, vector<16x8xf32>, vector<16x8xf32>, vector<16x8xf32>, vector<16x8xf32>, vector<16x8xf32> -> vector<16x128xf32>
    %55 = vector.broadcast %0 : vector<1x128xf32> to vector<16x128xf32>
    %56 = arith.mulf %54, %55 : vector<16x128xf32>
    %57 = vector.broadcast %1 : vector<1x128xf32> to vector<16x128xf32>
    %58 = arith.addf %56, %57 : vector<16x128xf32>
    %cst_13 = arith.constant 0.000000e+00 : f32
    %59 = vector.broadcast %cst_13 : f32 to vector<16x128xf32>
    %60 = arith.maximumf %58, %59 : vector<16x128xf32>
    %c0_14 = arith.constant 0 : index
    %c0_15 = arith.constant 0 : index
    %c0_16 = arith.constant 0 : index
    %c0_17 = arith.constant 0 : index
    %c0_18 = arith.constant 0 : index
    %61 = vector.load %arg6[%c0_14, %c0_15, %c0_16, %c0_17, %c0_18] : memref<1x1x2x16x128xf32, #tpu.memory_space<vmem>>, vector<1x1x1x16x128xf32>
    %62 = vector.shape_cast %61 : vector<1x1x1x16x128xf32> to vector<16x128xf32>
    %63 = vector.shape_cast %60 : vector<16x128xf32> to vector<1x1x1x16x128xf32>
    tpu.vector_store %arg6[%c0_14, %c0_15, %c0_16, %c0_17, %c0_18], %63 {strides = array<i32>} : memref<1x1x2x16x128xf32, #tpu.memory_space<vmem>>, vector<1x1x1x16x128xf32>,
    %64 = tpu.concatenate %7, %8, %14, %15 in 2 : vector<16x16x4xbf16>, vector<16x16x4xbf16>, vector<16x16x4xbf16>, vector<16x16x4xbf16> -> vector<16x16x16xbf16>
    %65 = vector.shape_cast %64 : vector<16x16x16xbf16> to vector<256x16xbf16>
    %c0_19 = arith.constant 0 : index
    %c1 = arith.constant 1 : index
    %c0_20 = arith.constant 0 : index
    %c0_21 = arith.constant 0 : index
    %66 = vector.load %arg3[%c0_19, %c1, %c0_20, %c0_21] : memref<1x2x16x8xbf16, #tpu.memory_space<vmem>>, vector<1x1x16x8xbf16>
    %67 = vector.shape_cast %66 : vector<1x1x16x8xbf16> to vector<16x8xbf16>
    %cst_22 = arith.constant dense<0.000000e+00> : vector<256x8xf32>
    %68 = tpu.matmul %65, %67, %cst_22 {dimension_numbers = #tpu.dot_dimension_numbers<[1], [0], [0], [1], [0, 0, 1, 1], [], []>} : vector<256x16xbf16>, vector<16x8xbf16>, vector<256x8xf32> -> vector<256x8xf32>
    %69 = vector.shape_cast %68 : vector<256x8xf32> to vector<16x16x8xf32>
    %70 = vector.extract_strided_slice %69 {offsets = [0, 0, 0], sizes = [16, 1, 8], strides = [1, 1, 1]} : vector<16x16x8xf32> to vector<16x1x8xf32>
    %71 = vector.shape_cast %70 : vector<16x1x8xf32> to vector<16x8xf32>
    %72 = vector.extract_strided_slice %69 {offsets = [0, 1, 0], sizes = [16, 1, 8], strides = [1, 1, 1]} : vector<16x16x8xf32> to vector<16x1x8xf32>
    %73 = vector.shape_cast %72 : vector<16x1x8xf32> to vector<16x8xf32>
    %74 = vector.extract_strided_slice %69 {offsets = [0, 2, 0], sizes = [16, 1, 8], strides = [1, 1, 1]} : vector<16x16x8xf32> to vector<16x1x8xf32>
    %75 = vector.shape_cast %74 : vector<16x1x8xf32> to vector<16x8xf32>
    %76 = vector.extract_strided_slice %69 {offsets = [0, 3, 0], sizes = [16, 1, 8], strides = [1, 1, 1]} : vector<16x16x8xf32> to vector<16x1x8xf32>
    %77 = vector.shape_cast %76 : vector<16x1x8xf32> to vector<16x8xf32>
    %78 = vector.extract_strided_slice %69 {offsets = [0, 4, 0], sizes = [16, 1, 8], strides = [1, 1, 1]} : vector<16x16x8xf32> to vector<16x1x8xf32>
    %79 = vector.shape_cast %78 : vector<16x1x8xf32> to vector<16x8xf32>
    %80 = vector.extract_strided_slice %69 {offsets = [0, 5, 0], sizes = [16, 1, 8], strides = [1, 1, 1]} : vector<16x16x8xf32> to vector<16x1x8xf32>
    %81 = vector.shape_cast %80 : vector<16x1x8xf32> to vector<16x8xf32>
    %82 = vector.extract_strided_slice %69 {offsets = [0, 6, 0], sizes = [16, 1, 8], strides = [1, 1, 1]} : vector<16x16x8xf32> to vector<16x1x8xf32>
    %83 = vector.shape_cast %82 : vector<16x1x8xf32> to vector<16x8xf32>
    %84 = vector.extract_strided_slice %69 {offsets = [0, 7, 0], sizes = [16, 1, 8], strides = [1, 1, 1]} : vector<16x16x8xf32> to vector<16x1x8xf32>
    %85 = vector.shape_cast %84 : vector<16x1x8xf32> to vector<16x8xf32>
    %86 = vector.extract_strided_slice %69 {offsets = [0, 8, 0], sizes = [16, 1, 8], strides = [1, 1, 1]} : vector<16x16x8xf32> to vector<16x1x8xf32>
    %87 = vector.shape_cast %86 : vector<16x1x8xf32> to vector<16x8xf32>
    %88 = vector.extract_strided_slice %69 {offsets = [0, 9, 0], sizes = [16, 1, 8], strides = [1, 1, 1]} : vector<16x16x8xf32> to vector<16x1x8xf32>
    %89 = vector.shape_cast %88 : vector<16x1x8xf32> to vector<16x8xf32>
    %90 = vector.extract_strided_slice %69 {offsets = [0, 10, 0], sizes = [16, 1, 8], strides = [1, 1, 1]} : vector<16x16x8xf32> to vector<16x1x8xf32>
    %91 = vector.shape_cast %90 : vector<16x1x8xf32> to vector<16x8xf32>
    %92 = vector.extract_strided_slice %69 {offsets = [0, 11, 0], sizes = [16, 1, 8], strides = [1, 1, 1]} : vector<16x16x8xf32> to vector<16x1x8xf32>
    %93 = vector.shape_cast %92 : vector<16x1x8xf32> to vector<16x8xf32>
    %94 = vector.extract_strided_slice %69 {offsets = [0, 12, 0], sizes = [16, 1, 8], strides = [1, 1, 1]} : vector<16x16x8xf32> to vector<16x1x8xf32>
    %95 = vector.shape_cast %94 : vector<16x1x8xf32> to vector<16x8xf32>
    %96 = vector.extract_strided_slice %69 {offsets = [0, 13, 0], sizes = [16, 1, 8], strides = [1, 1, 1]} : vector<16x16x8xf32> to vector<16x1x8xf32>
    %97 = vector.shape_cast %96 : vector<16x1x8xf32> to vector<16x8xf32>
    %98 = vector.extract_strided_slice %69 {offsets = [0, 14, 0], sizes = [16, 1, 8], strides = [1, 1, 1]} : vector<16x16x8xf32> to vector<16x1x8xf32>
    %99 = vector.shape_cast %98 : vector<16x1x8xf32> to vector<16x8xf32>
    %100 = vector.extract_strided_slice %69 {offsets = [0, 15, 0], sizes = [16, 1, 8], strides = [1, 1, 1]} : vector<16x16x8xf32> to vector<16x1x8xf32>
    %101 = vector.shape_cast %100 : vector<16x1x8xf32> to vector<16x8xf32>
    %102 = tpu.concatenate %71, %73, %75, %77, %79, %81, %83, %85, %87, %89, %91, %93, %95, %97, %99, %101 in 1 : vector<16x8xf32>, vector<16x8xf32>, vector<16x8xf32>, vector<16x8xf32>, vector<16x8xf32>, vector<16x8xf32>, vector<16x8xf32>, vector<16x8xf32>, vector<16x8xf32>, vector<16x8xf32>, vector<16x8xf32>, vector<16x8xf32>, vector<16x8xf32>, vector<16x8xf32>, vector<16x8xf32>, vector<16x8xf32> -> vector<16x128xf32>
    %103 = vector.broadcast %0 : vector<1x128xf32> to vector<16x128xf32>
    %104 = arith.mulf %102, %103 : vector<16x128xf32>
    %105 = vector.broadcast %1 : vector<1x128xf32> to vector<16x128xf32>
    %106 = arith.addf %104, %105 : vector<16x128xf32>
    %cst_23 = arith.constant 0.000000e+00 : f32
    %107 = vector.broadcast %cst_23 : f32 to vector<16x128xf32>
    %108 = arith.maximumf %106, %107 : vector<16x128xf32>
    %c0_24 = arith.constant 0 : index
    %c0_25 = arith.constant 0 : index
    %c1_26 = arith.constant 1 : index
    %c0_27 = arith.constant 0 : index
    %c0_28 = arith.constant 0 : index
    %109 = vector.load %arg6[%c0_24, %c0_25, %c1_26, %c0_27, %c0_28] : memref<1x1x2x16x128xf32, #tpu.memory_space<vmem>>, vector<1x1x1x16x128xf32>
    %110 = vector.shape_cast %109 : vector<1x1x1x16x128xf32> to vector<16x128xf32>
    %111 = vector.shape_cast %108 : vector<16x128xf32> to vector<1x1x1x16x128xf32>
    tpu.vector_store %arg6[%c0_24, %c0_25, %c1_26, %c0_27, %c0_28], %111 {strides = array<i32>} : memref<1x1x2x16x128xf32, #tpu.memory_space<vmem>>, vector<1x1x1x16x128xf32>,
    return
  }
  func.func @transform_0(%arg0: i32, %arg1: i32) -> (i32, i32, i32, i32) {
    %c0_i32 = arith.constant 0 : i32
    %c0_i32_0 = arith.constant 0 : i32
    %c0_i32_1 = arith.constant 0 : i32
    %c0_i32_2 = arith.constant 0 : i32
    return %arg0, %c0_i32, %c0_i32_0, %c0_i32_1 : i32, i32, i32, i32
  }
  func.func @transform_1(%arg0: i32, %arg1: i32) -> (i32, i32, i32, i32) {
    %c0_i32 = arith.constant 0 : i32
    %c0_i32_0 = arith.constant 0 : i32
    %c0_i32_1 = arith.constant 0 : i32
    %c0_i32_2 = arith.constant 0 : i32
    return %arg1, %c0_i32, %c0_i32_0, %c0_i32_1 : i32, i32, i32, i32
  }
  func.func @transform_2(%arg0: i32, %arg1: i32) -> (i32, i32) {
    %c0_i32 = arith.constant 0 : i32
    %c0_i32_0 = arith.constant 0 : i32
    %c0_i32_1 = arith.constant 0 : i32
    return %c0_i32, %c0_i32_0 : i32, i32
  }
  func.func @transform_3(%arg0: i32, %arg1: i32) -> (i32, i32) {
    %c0_i32 = arith.constant 0 : i32
    %c0_i32_0 = arith.constant 0 : i32
    %c0_i32_1 = arith.constant 0 : i32
    return %c0_i32, %c0_i32_0 : i32, i32
  }
  func.func @transform_4(%arg0: i32, %arg1: i32) -> (i32, i32, i32, i32, i32) {
    %c0_i32 = arith.constant 0 : i32
    %c0_i32_0 = arith.constant 0 : i32
    %c0_i32_1 = arith.constant 0 : i32
    %c0_i32_2 = arith.constant 0 : i32
    return %arg0, %arg1, %c0_i32, %c0_i32_0, %c0_i32_1 : i32, i32, i32, i32, i32
  }
}

</mosaic_0001>

<llo_original>
// kernel: tpu_custom_call.1
$region0: #{tpu_custom_call.1}
  #allocation0 [shape = 'u32[]', space=smem, size = 0x4, offset = 0x4, fixed_abs, tag = 'smem constant byte address 0x4 - core index']
  #allocation1 [shape = 'u32[144,128]{1,0:T(1,128)}', space=vmem, size = 0x12000, scoped, tag = 'internal scratch']
  %s0 = inlined_call_operand.vmem [shape: bf16[2,18,18,4], index: 0, kind: input, shape index: {}]
  %s1 = inlined_call_operand.vmem [shape: bf16[2,2,16,8], index: 1, kind: input, shape index: {}]
  %s2 = inlined_call_operand.vmem [shape: f32[1,128], index: 2, kind: input, shape index: {}]
  %s3 = inlined_call_operand.vmem [shape: f32[1,128], index: 3, kind: input, shape index: {}]
  %s4 = inlined_call_operand.hbm [shape: f32[2,2,2,16,128], index: 4, kind: output, shape index: {}]
  %s5 = sld [smem:[#allocation0]]
  $region49: #{tpu_custom_call.1} parent=0
    _
  %s7 = ssub.s32 1, %s5
  %s8 = scalar_select 0, %s7, %s5
  $region1: #{tpu_custom_call.1} parent=0
    #allocation2 [shape = 'u8[32768]{0}', space=vmem, size = 0x8000, scoped, tag = 'output window, operand 0']
    #allocation3 [shape = 's32[2]{0}', space=sflag, size = 0x8, scoped, tag = 'scoped memory for tpu_custom_call.1']
    %9 = vsyncpa [#allocation3], 0
    %s10 = scalar_lea.sflag [#allocation3], 1
    %11 = vsyncpa %s10, 0
    loop: start=0, step=1, limit=6
    $region2: #{tpu_custom_call.1} parent=1 // loop_pre_header
      _
    $region3: #{tpu_custom_call.1} parent=1 // loop_header
      %s13 = sphi 0, %s17
      %p14 = scmp.ge.s32.totalorder %s13, 6
      %s20 = sphi 0, %s32
      %s21 = sphi 0, %s28
      %s22 = sphi 0, %s20
      %s23 = sphi 0, %s21
      %s24 = sphi 0, %s22
      %s25 = sphi 0, %s23
      %s35 = sphi 0, %s37
      %s38 = sphi 0, %s35
      %s39 = sphi 0, %s38
      %s55 = sphi 0, %s39
      %s61 = sphi 0, %s63
      %s64 = sphi 0, %s61
      %s65 = sphi 0, %s64
      %s81 = sphi 0, %s65
      %s85 = sphi 0, %s85
      %s87 = sphi 0, %s85
      %s88 = sphi 0, %s87
      %s102 = sphi 0, %s88
      %s106 = sphi 0, %s106
      %s108 = sphi 0, %s106
      %s109 = sphi 0, %s108
      %s123 = sphi 0, %s109
      %s131 = sphi 0, %s133
      %s134 = sphi 0, %s131
      %s135 = sphi 0, %s134
      %s151 = sphi 0, %s135
    $region4: #{tpu_custom_call.1} parent=1 // loop_header_branch
      %16 = sbr.rel (%p14) target = $region8
    $region5: #{tpu_custom_call.1} parent=1 // loop_body
      %s18 = ssub.s32 %s13, 1
      %s19 = ssub.s32 %s13, 2
      %s26 = sadd.s32 1, %s21
      %p27 = scmp.ge.s32.totalorder %s26, 2
      %s28 = scalar_select %p27, 0, %s26
      %s29 = sadd.s32 1, %s20
      %s30 = scalar_select %p27, %s29, %s20
      %p31 = scmp.ge.s32.totalorder %s30, 2
      %s32 = scalar_select %p31, 0, %s30
      %s33 = ssub.s32 %s20, %s32
      %p34 = scmp.eq.s32.totalorder %s33, 0
      %s36 = sadd.s32 %s35, 1
      %s37 = scalar_select %p34, %s35, %s36
      %p40 = pneg %p34
      %p41 = scmp.eq.s32.totalorder %s13, 3
      %p42 = por %p40, %p41
      %p43 = scmp.ne.s32.totalorder %s35, %s38
      %p44 = scmp.eq.s32.totalorder %s13, 0
      %p45 = por %p43, %p44
      %p46 = scmp.ne.s32.totalorder %s35, %s38
      %p47 = scmp.eq.s32.totalorder %s18, 3
      %p48 = por %p46, %p47
      %p49 = scmp.ne.s32.totalorder %s38, %s39
      %p50 = scmp.eq.s32.totalorder %s18, 0
      %p51 = por %p49, %p50
      %p52 = scmp.ne.s32.totalorder %s38, %s39
      %p53 = scmp.eq.s32.totalorder %s19, 3
      %p54 = por %p52, %p53
      %p56 = scmp.ne.s32.totalorder %s39, %s55
      %p57 = scmp.eq.s32.totalorder %s19, 0
      %p58 = por %p56, %p57
      %s59 = ssub.s32 %s21, %s28
      %p60 = scmp.eq.s32.totalorder %s59, 0
      %s62 = sadd.s32 %s61, 1
      %s63 = scalar_select %p60, %s61, %s62
      %p66 = pneg %p60
      %p67 = scmp.eq.s32.totalorder %s13, 3
      %p68 = por %p66, %p67
      %p69 = scmp.ne.s32.totalorder %s61, %s64
      %p70 = scmp.eq.s32.totalorder %s13, 0
      %p71 = por %p69, %p70
      %p72 = scmp.ne.s32.totalorder %s61, %s64
      %p73 = scmp.eq.s32.totalorder %s18, 3
      %p74 = por %p72, %p73
      %p75 = scmp.ne.s32.totalorder %s64, %s65
      %p76 = scmp.eq.s32.totalorder %s18, 0
      %p77 = por %p75, %p76
      %p78 = scmp.ne.s32.totalorder %s64, %s65
      %p79 = scmp.eq.s32.totalorder %s19, 3
      %p80 = por %p78, %p79
      %p82 = scmp.ne.s32.totalorder %s65, %s81
      %p83 = scmp.eq.s32.totalorder %s19, 0
      %p84 = por %p82, %p83
      %s86 = sadd.s32 %s85, 1
      %p89 = scmp.eq.s32.totalorder %s13, 3
      %p90 = scmp.ne.s32.totalorder %s85, %s87
      %p91 = scmp.eq.s32.totalorder %s13, 0
      %p92 = por %p90, %p91
      %p93 = scmp.ne.s32.totalorder %s85, %s87
      %p94 = scmp.eq.s32.totalorder %s18, 3
      %p95 = por %p93, %p94
      %p96 = scmp.ne.s32.totalorder %s87, %s88
      %p97 = scmp.eq.s32.totalorder %s18, 0
      %p98 = por %p96, %p97
      %p99 = scmp.ne.s32.totalorder %s87, %s88
      %p100 = scmp.eq.s32.totalorder %s19, 3
      %p101 = por %p99, %p100
      %p103 = scmp.ne.s32.totalorder %s88, %s102
      %p104 = scmp.eq.s32.totalorder %s19, 0
      %p105 = por %p103, %p104
      %s107 = sadd.s32 %s106, 1
      %p110 = scmp.eq.s32.totalorder %s13, 3
      %p111 = scmp.ne.s32.totalorder %s106, %s108
      %p112 = scmp.eq.s32.totalorder %s13, 0
      %p113 = por %p111, %p112
      %p114 = scmp.ne.s32.totalorder %s106, %s108
      %p115 = scmp.eq.s32.totalorder %s18, 3
      %p116 = por %p114, %p115
      %p117 = scmp.ne.s32.totalorder %s108, %s109
      %p118 = scmp.eq.s32.totalorder %s18, 0
      %p119 = por %p117, %p118
      %p120 = scmp.ne.s32.totalorder %s108, %s109
      %p121 = scmp.eq.s32.totalorder %s19, 3
      %p122 = por %p120, %p121
      %p124 = scmp.ne.s32.totalorder %s109, %s123
      %p125 = scmp.eq.s32.totalorder %s19, 0
      %p126 = por %p124, %p125
      %s127 = ssub.s32 %s20, %s32
      %s128 = ssub.s32 %s21, %s28
      %s129 = sor.u32 %s127, %s128
      %p130 = scmp.eq.s32.totalorder %s129, 0
      %s132 = sadd.s32 %s131, 1
      %s133 = scalar_select %p130, %s131, %s132
      %p136 = pneg %p130
      %p137 = scmp.eq.s32.totalorder %s13, 3
      %p138 = por %p136, %p137
      %p139 = scmp.ne.s32.totalorder %s131, %s134
      %p140 = scmp.eq.s32.totalorder %s13, 0
      %p141 = por %p139, %p140
      %p142 = scmp.ne.s32.totalorder %s131, %s134
      %p143 = scmp.eq.s32.totalorder %s18, 3
      %p144 = por %p142, %p143
      %p145 = scmp.ne.s32.totalorder %s134, %s135
      %p146 = scmp.eq.s32.totalorder %s18, 0
      %p147 = por %p145, %p146
      %p148 = scmp.ne.s32.totalorder %s134, %s135
      %p149 = scmp.eq.s32.totalorder %s19, 3
      %p150 = por %p148, %p149
      %p152 = scmp.ne.s32.totalorder %s135, %s151
      %p153 = scmp.eq.s32.totalorder %s19, 0
      %p154 = por %p152, %p153
      %p155 = scmp.le.s32.totalorder 1, %s13
      %p156 = scmp.lt.s32.totalorder %s13, 5
      %p157 = pnand %p155, %p156
      %p158 = pneg %p157
      // Predicated region
      $region9: #{tpu_custom_call.1} parent=5 // pred_check
        _
      $region10: #{tpu_custom_call.1} parent=5 // pred_check_branch
        %160 = sbr.rel (%p157) target = $region12
      $region11: #{tpu_custom_call.1} parent=5 // pred_region
        %s161 = ssub.s32 %s13, 1
        // Predicated region
        $region13: #{tpu_custom_call.1} parent=11 // pred_check
          %p162 = pneg %p98
        $region14: #{tpu_custom_call.1} parent=11 // pred_check_branch
          %164 = sbr.rel (%p162) target = $region16
        $region15: #{tpu_custom_call.1} parent=11 // pred_region
          _
        $region16: #{tpu_custom_call.1} parent=11 // pred_fallthru
          _
        // Predicated region
        $region17: #{tpu_custom_call.1} parent=11 // pred_check
          %p165 = pneg %p119
        $region18: #{tpu_custom_call.1} parent=11 // pred_check_branch
          %167 = sbr.rel (%p165) target = $region20
        $region19: #{tpu_custom_call.1} parent=11 // pred_region
          _
        $region20: #{tpu_custom_call.1} parent=11 // pred_fallthru
          _
      $region12: #{tpu_custom_call.1} parent=5 // pred_fallthru
        _
      %p168 = scmp.lt.s32.totalorder %s13, 4
      // Predicated region
      $region21: #{tpu_custom_call.1} parent=5 // pred_check
        %p169 = pneg %p168
      $region22: #{tpu_custom_call.1} parent=5 // pred_check_branch
        %171 = sbr.rel (%p169) target = $region24
      $region23: #{tpu_custom_call.1} parent=5 // pred_region
        // Predicated region
        $region25: #{tpu_custom_call.1} parent=23 // pred_check
          %p172 = pneg %p45
        $region26: #{tpu_custom_call.1} parent=23 // pred_check_branch
          %174 = sbr.rel (%p172) target = $region28
        $region27: #{tpu_custom_call.1} parent=23 // pred_region
          %p175 = scmp.lt.s32.totalorder %s20, 1
          %s176 = scalar_select %p175, %s20, 1
          %s177 = smul.addr %s176, 54
          %s178 = smul.addr %s177, 4
          %s179 = scalar_lea.vmem %s0, %s178
        $region28: #{tpu_custom_call.1} parent=23 // pred_fallthru
          _
        // Predicated region
        $region29: #{tpu_custom_call.1} parent=23 // pred_check
          %p180 = pneg %p71
        $region30: #{tpu_custom_call.1} parent=23 // pred_check_branch
          %182 = sbr.rel (%p180) target = $region32
        $region31: #{tpu_custom_call.1} parent=23 // pred_region
          %p183 = scmp.lt.s32.totalorder %s21, 1
          %s184 = scalar_select %p183, %s21, 1
          %s185 = smul.addr %s184, 4
          %s186 = smul.addr %s185, 4
          %s187 = scalar_lea.vmem %s1, %s186
        $region32: #{tpu_custom_call.1} parent=23 // pred_fallthru
          _
      $region24: #{tpu_custom_call.1} parent=5 // pred_fallthru
        _
      %p188 = scmp.le.s32.totalorder 1, %s13
      %p189 = scmp.lt.s32.totalorder %s13, 5
      %p190 = pnand %p188, %p189
      %p191 = pneg %p190
      // Predicated region
      $region33: #{tpu_custom_call.1} parent=5 // pred_check
        _
      $region34: #{tpu_custom_call.1} parent=5 // pred_check_branch
        %193 = sbr.rel (%p190) target = $region36
      $region35: #{tpu_custom_call.1} parent=5 // pred_region
        %s194 = ssub.s32 %s13, 1
        %p195 = scmp.lt.s32.totalorder %s22, 1
        %s196 = scalar_select %p195, %s22, 1
        %s197 = smul.addr %s196, 54
        %s198 = smul.addr %s197, 4
        %s199 = scalar_lea.vmem %s0, %s198
        %p200 = pneg %p51
        %p201 = pneg %p48
        %p202 = scmp.lt.s32.totalorder %s23, 1
        %s203 = scalar_select %p202, %s23, 1
        %s204 = smul.addr %s203, 4
        %s205 = smul.addr %s204, 4
        %s206 = scalar_lea.vmem %s1, %s205
        %p207 = pneg %p77
        %p208 = pneg %p74
        %p209 = pneg %p98
        %p210 = pneg %p95
        %p211 = pneg %p119
        %p212 = pneg %p116
        %p213 = pneg %p147
        %p214 = pneg %p144
        %s215 = sand.u32 %s134, 1
        %s216 = scalar_lea.sflag [#allocation3], %s215
        %s217 = sand.u32 %s134, 1
        %s218 = smul.addr %s217, 32
        %s219 = scalar_lea.vmem [#allocation2], %s218
        %p220 = scmp.lt.s32.totalorder %s22, 1
        %s221 = scalar_select %p220, %s22, 1
        %s222 = smul.addr %s221, 54
        %s223 = smul.addr %s222, 4
        %s224 = scalar_lea.vmem %s0, %s223
        %p225 = scmp.lt.s32.totalorder %s23, 1
        %s226 = scalar_select %p225, %s23, 1
        %s227 = smul.addr %s226, 4
        %s228 = smul.addr %s227, 4
        %s229 = scalar_lea.vmem %s1, %s228
        %v231 = vld [vmem:[%s2] sm:$0x1]
        %v232 = vld [vmem:[%s3] sm:$0x1]
        %s233 = smul.u32 %s23, 3
        %s234 = smul.addr %s233, 4
        %s235 = scalar_lea.vmem %s224, %s234
        %v236 = vld [vmem:[%s235] sm:$0xf]
        %v237 = vld [vmem:[%s235 + $0x4] sm:$0xf]
        %v238 = vld [vmem:[%s235 + $0x8] sm:$0x1]
        %v239 = vld [vmem:[%s235 + $0xc] sm:$0xf]
        %v240 = vld [vmem:[%s235 + $0x10] sm:$0xf]
        %v241 = vld [vmem:[%s235 + $0x14] sm:$0x1]
        %v242 = vld [vmem:[%s235 + $0x18] sm:$0xf]
        %v243 = vld [vmem:[%s235 + $0x1c] sm:$0xf]
        %v244 = vld [vmem:[%s235 + $0x20] sm:$0x1]
        %v245 = vld [vmem:[%s235 + $0x24] sm:$0xf]
        %v246 = vld [vmem:[%s235 + $0x28] sm:$0xf]
        %v247 = vld [vmem:[%s235 + $0x2c] sm:$0x1]
        %v248 = vld [vmem:[%s235 + $0x30] sm:$0xf]
        %v249 = vld [vmem:[%s235 + $0x34] sm:$0xf]
        %v250 = vld [vmem:[%s235 + $0x38] sm:$0x1]
        %v251 = vld [vmem:[%s235 + $0x3c] sm:$0xf]
        %v252 = vld [vmem:[%s235 + $0x40] sm:$0xf]
        %v253 = vld [vmem:[%s235 + $0x44] sm:$0x1]
        %v254 = vld [vmem:[%s235 + $0x48] sm:$0xf]
        %v255 = vld [vmem:[%s235 + $0x4c] sm:$0xf]
        %v256 = vld [vmem:[%s235 + $0x50] sm:$0x1]
        %v257 = vld [vmem:[%s235 + $0x54] sm:$0xf]
        %v258 = vld [vmem:[%s235 + $0x58] sm:$0xf]
        %v259 = vld [vmem:[%s235 + $0x5c] sm:$0x1]
        %v260 = vld [vmem:[%s235 + $0x60] sm:$0xf]
        %v261 = vld [vmem:[%s235 + $0x64] sm:$0xf]
        %v262 = vld [vmem:[%s235 + $0x68] sm:$0x1]
        %v263 = vld [vmem:[%s235 + $0x6c] sm:$0xf]
        %v264 = vld [vmem:[%s235 + $0x70] sm:$0xf]
        %v265 = vld [vmem:[%s235 + $0x74] sm:$0x1]
        %v266 = vld [vmem:[%s235 + $0x78] sm:$0xf]
        %v267 = vld [vmem:[%s235 + $0x7c] sm:$0xf]
        %v268 = vld [vmem:[%s235 + $0x80] sm:$0x1]
        %v269 = vld [vmem:[%s235 + $0x84] sm:$0xf]
        %v270 = vld [vmem:[%s235 + $0x88] sm:$0xf]
        %v271 = vld [vmem:[%s235 + $0x8c] sm:$0x1]
        %v272 = vld [vmem:[%s235 + $0x90] sm:$0xf]
        %v273 = vld [vmem:[%s235 + $0x94] sm:$0xf]
        %v274 = vld [vmem:[%s235 + $0x98] sm:$0x1]
        %v275 = vld [vmem:[%s235 + $0x9c] sm:$0xf]
        %v276 = vld [vmem:[%s235 + $0xa0] sm:$0xf]
        %v277 = vld [vmem:[%s235 + $0xa4] sm:$0x1]
        %v278 = vld [vmem:[%s235 + $0xa8] sm:$0xf]
        %v279 = vld [vmem:[%s235 + $0xac] sm:$0xf]
        %v280 = vld [vmem:[%s235 + $0xb0] sm:$0x1]
        %v281 = vld [vmem:[%s235 + $0xb4] sm:$0xf]
        %v282 = vld [vmem:[%s235 + $0xb8] sm:$0xf]
        %v283 = vld [vmem:[%s235 + $0xbc] sm:$0x1]
        %s284 = sadd.s32 %s23, 1
        %s285 = smul.u32 %s284, 3
        %s286 = smul.addr %s285, 4
        %s287 = scalar_lea.vmem %s224, %s286
        %v288 = vld [vmem:[%s287] sm:$0xf]
        %v289 = vld [vmem:[%s287 + $0x4] sm:$0xf]
        %v290 = vld [vmem:[%s287 + $0x8] sm:$0x1]
        %v291 = vld [vmem:[%s287 + $0xc] sm:$0xf]
        %v292 = vld [vmem:[%s287 + $0x10] sm:$0xf]
        %v293 = vld [vmem:[%s287 + $0x14] sm:$0x1]
        %v294 = vld [vmem:[%s287 + $0x18] sm:$0xf]
        %v295 = vld [vmem:[%s287 + $0x1c] sm:$0xf]
        %v296 = vld [vmem:[%s287 + $0x20] sm:$0x1]
        %v297 = vld [vmem:[%s287 + $0x24] sm:$0xf]
        %v298 = vld [vmem:[%s287 + $0x28] sm:$0xf]
        %v299 = vld [vmem:[%s287 + $0x2c] sm:$0x1]
        %v300 = vld [vmem:[%s287 + $0x30] sm:$0xf]
        %v301 = vld [vmem:[%s287 + $0x34] sm:$0xf]
        %v302 = vld [vmem:[%s287 + $0x38] sm:$0x1]
        %v303 = vld [vmem:[%s287 + $0x3c] sm:$0xf]
        %v304 = vld [vmem:[%s287 + $0x40] sm:$0xf]
        %v305 = vld [vmem:[%s287 + $0x44] sm:$0x1]
        %v306 = vld [vmem:[%s287 + $0x48] sm:$0xf]
        %v307 = vld [vmem:[%s287 + $0x4c] sm:$0xf]
        %v308 = vld [vmem:[%s287 + $0x50] sm:$0x1]
        %v309 = vld [vmem:[%s287 + $0x54] sm:$0xf]
        %v310 = vld [vmem:[%s287 + $0x58] sm:$0xf]
        %v311 = vld [vmem:[%s287 + $0x5c] sm:$0x1]
        %v312 = vld [vmem:[%s287 + $0x60] sm:$0xf]
        %v313 = vld [vmem:[%s287 + $0x64] sm:$0xf]
        %v314 = vld [vmem:[%s287 + $0x68] sm:$0x1]
        %v315 = vld [vmem:[%s287 + $0x6c] sm:$0xf]
        %v316 = vld [vmem:[%s287 + $0x70] sm:$0xf]
        %v317 = vld [vmem:[%s287 + $0x74] sm:$0x1]
        %v318 = vld [vmem:[%s287 + $0x78] sm:$0xf]
        %v319 = vld [vmem:[%s287 + $0x7c] sm:$0xf]
        %v320 = vld [vmem:[%s287 + $0x80] sm:$0x1]
        %v321 = vld [vmem:[%s287 + $0x84] sm:$0xf]
        %v322 = vld [vmem:[%s287 + $0x88] sm:$0xf]
        %v323 = vld [vmem:[%s287 + $0x8c] sm:$0x1]
        %v324 = vld [vmem:[%s287 + $0x90] sm:$0xf]
        %v325 = vld [vmem:[%s287 + $0x94] sm:$0xf]
        %v326 = vld [vmem:[%s287 + $0x98] sm:$0x1]
        %v327 = vld [vmem:[%s287 + $0x9c] sm:$0xf]
        %v328 = vld [vmem:[%s287 + $0xa0] sm:$0xf]
        %v329 = vld [vmem:[%s287 + $0xa4] sm:$0x1]
        %v330 = vld [vmem:[%s287 + $0xa8] sm:$0xf]
        %v331 = vld [vmem:[%s287 + $0xac] sm:$0xf]
        %v332 = vld [vmem:[%s287 + $0xb0] sm:$0x1]
        %v333 = vld [vmem:[%s287 + $0xb4] sm:$0xf]
        %v334 = vld [vmem:[%s287 + $0xb8] sm:$0xf]
        %v335 = vld [vmem:[%s287 + $0xbc] sm:$0x1]
        %v368 = vunpack.c.l.b16 %v236
        %v369 = vunpack.c.l.b16 %v237
        %v370 = vunpack.c.l.b16 %v239
        %v371 = vunpack.c.l.b16 %v240
        %v372 = vunpack.c.l.b16 %v242
        %v373 = vunpack.c.l.b16 %v243
        %v374 = vunpack.c.l.b16 %v245
        %v375 = vunpack.c.l.b16 %v246
        %v376 = vunpack.c.l.b16 %v248
        %v377 = vunpack.c.l.b16 %v249
        %v378 = vunpack.c.l.b16 %v251
        %v379 = vunpack.c.l.b16 %v252
        %v380 = vunpack.c.l.b16 %v254
        %v381 = vunpack.c.l.b16 %v255
        %v382 = vunpack.c.l.b16 %v257
        %v383 = vunpack.c.l.b16 %v258
        %v384 = vunpack.c.l.b16 %v260
        %v385 = vunpack.c.l.b16 %v261
        %v386 = vunpack.c.l.b16 %v263
        %v387 = vunpack.c.l.b16 %v264
        %v388 = vunpack.c.l.b16 %v266
        %v389 = vunpack.c.l.b16 %v267
        %v390 = vunpack.c.l.b16 %v269
        %v391 = vunpack.c.l.b16 %v270
        %v392 = vunpack.c.l.b16 %v272
        %v393 = vunpack.c.l.b16 %v273
        %v394 = vunpack.c.l.b16 %v275
        %v395 = vunpack.c.l.b16 %v276
        %v396 = vunpack.c.l.b16 %v278
        %v397 = vunpack.c.l.b16 %v279
        %v398 = vunpack.c.l.b16 %v281
        %v399 = vunpack.c.l.b16 %v282
        %v400 = vpack.c.b16 %v369, %v368
        %v401 = vpack.c.b16 %v371, %v370
        %v402 = vpack.c.b16 %v373, %v372
        %v403 = vpack.c.b16 %v375, %v374
        %v404 = vpack.c.b16 %v377, %v376
        %v405 = vpack.c.b16 %v379, %v378
        %v406 = vpack.c.b16 %v381, %v380
        %v407 = vpack.c.b16 %v383, %v382
        %v408 = vpack.c.b16 %v385, %v384
        %v409 = vpack.c.b16 %v387, %v386
        %v410 = vpack.c.b16 %v389, %v388
        %v411 = vpack.c.b16 %v391, %v390
        %v412 = vpack.c.b16 %v393, %v392
        %v413 = vpack.c.b16 %v395, %v394
        %v414 = vpack.c.b16 %v397, %v396
        %v415 = vpack.c.b16 %v399, %v398
        %v432 = vunpack.c.l.b16 %v238
        %v433 = vunpack.c.l.b16 %v241
        %v434 = vunpack.c.l.b16 %v244
        %v435 = vunpack.c.l.b16 %v247
        %v436 = vunpack.c.l.b16 %v250
        %v437 = vunpack.c.l.b16 %v253
        %v438 = vunpack.c.l.b16 %v256
        %v439 = vunpack.c.l.b16 %v259
        %v440 = vunpack.c.l.b16 %v262
        %v441 = vunpack.c.l.b16 %v265
        %v442 = vunpack.c.l.b16 %v268
        %v443 = vunpack.c.l.b16 %v271
        %v444 = vunpack.c.l.b16 %v274
        %v445 = vunpack.c.l.b16 %v277
        %v446 = vunpack.c.l.b16 %v280
        %v447 = vunpack.c.l.b16 %v283
        %v448 = vpack.c.b16 %v432, %v432
        %v449 = vpack.c.b16 %v433, %v433
        %v450 = vpack.c.b16 %v434, %v434
        %v451 = vpack.c.b16 %v435, %v435
        %v452 = vpack.c.b16 %v436, %v436
        %v453 = vpack.c.b16 %v437, %v437
        %v454 = vpack.c.b16 %v438, %v438
        %v455 = vpack.c.b16 %v439, %v439
        %v456 = vpack.c.b16 %v440, %v440
        %v457 = vpack.c.b16 %v441, %v441
        %v458 = vpack.c.b16 %v442, %v442
        %v459 = vpack.c.b16 %v443, %v443
        %v460 = vpack.c.b16 %v444, %v444
        %v461 = vpack.c.b16 %v445, %v445
        %v462 = vpack.c.b16 %v446, %v446
        %v463 = vpack.c.b16 %v447, %v447
        %vm464 = vsmask.f32 7424
        %v466 = vshrl.u32 %v400, 16
        %v468 = vshll.u32 %v400, 16
        %v470 = vrot.slane %v468, 1
        %v471 = vor.u32 %v466, %v470
        %v473 = vshll.u32 %v448, 16
        %v475 = vrot.slane %v473, 1
        %v476 = vsel %vm464, %v471, %v475
        %v478 = vshrl.u32 %v401, 16
        %v480 = vshll.u32 %v401, 16
        %v482 = vrot.slane %v480, 1
        %v483 = vor.u32 %v478, %v482
        %v485 = vshll.u32 %v449, 16
        %v487 = vrot.slane %v485, 1
        %v488 = vsel %vm464, %v483, %v487
        %v490 = vshrl.u32 %v402, 16
        %v492 = vshll.u32 %v402, 16
        %v494 = vrot.slane %v492, 1
        %v495 = vor.u32 %v490, %v494
        %v497 = vshll.u32 %v450, 16
        %v499 = vrot.slane %v497, 1
        %v500 = vsel %vm464, %v495, %v499
        %v502 = vshrl.u32 %v403, 16
        %v504 = vshll.u32 %v403, 16
        %v506 = vrot.slane %v504, 1
        %v507 = vor.u32 %v502, %v506
        %v509 = vshll.u32 %v451, 16
        %v511 = vrot.slane %v509, 1
        %v512 = vsel %vm464, %v507, %v511
        %v514 = vshrl.u32 %v404, 16
        %v516 = vshll.u32 %v404, 16
        %v518 = vrot.slane %v516, 1
        %v519 = vor.u32 %v514, %v518
        %v521 = vshll.u32 %v452, 16
        %v523 = vrot.slane %v521, 1
        %v524 = vsel %vm464, %v519, %v523
        %v526 = vshrl.u32 %v405, 16
        %v528 = vshll.u32 %v405, 16
        %v530 = vrot.slane %v528, 1
        %v531 = vor.u32 %v526, %v530
        %v533 = vshll.u32 %v453, 16
        %v535 = vrot.slane %v533, 1
        %v536 = vsel %vm464, %v531, %v535
        %v538 = vshrl.u32 %v406, 16
        %v540 = vshll.u32 %v406, 16
        %v542 = vrot.slane %v540, 1
        %v543 = vor.u32 %v538, %v542
        %v545 = vshll.u32 %v454, 16
        %v547 = vrot.slane %v545, 1
        %v548 = vsel %vm464, %v543, %v547
        %v550 = vshrl.u32 %v407, 16
        %v552 = vshll.u32 %v407, 16
        %v554 = vrot.slane %v552, 1
        %v555 = vor.u32 %v550, %v554
        %v557 = vshll.u32 %v455, 16
        %v559 = vrot.slane %v557, 1
        %v560 = vsel %vm464, %v555, %v559
        %v562 = vshrl.u32 %v408, 16
        %v564 = vshll.u32 %v408, 16
        %v566 = vrot.slane %v564, 1
        %v567 = vor.u32 %v562, %v566
        %v569 = vshll.u32 %v456, 16
        %v571 = vrot.slane %v569, 1
        %v572 = vsel %vm464, %v567, %v571
        %v574 = vshrl.u32 %v409, 16
        %v576 = vshll.u32 %v409, 16
        %v578 = vrot.slane %v576, 1
        %v579 = vor.u32 %v574, %v578
        %v581 = vshll.u32 %v457, 16
        %v583 = vrot.slane %v581, 1
        %v584 = vsel %vm464, %v579, %v583
        %v586 = vshrl.u32 %v410, 16
        %v588 = vshll.u32 %v410, 16
        %v590 = vrot.slane %v588, 1
        %v591 = vor.u32 %v586, %v590
        %v593 = vshll.u32 %v458, 16
        %v595 = vrot.slane %v593, 1
        %v596 = vsel %vm464, %v591, %v595
        %v598 = vshrl.u32 %v411, 16
        %v600 = vshll.u32 %v411, 16
        %v602 = vrot.slane %v600, 1
        %v603 = vor.u32 %v598, %v602
        %v605 = vshll.u32 %v459, 16
        %v607 = vrot.slane %v605, 1
        %v608 = vsel %vm464, %v603, %v607
        %v610 = vshrl.u32 %v412, 16
        %v612 = vshll.u32 %v412, 16
        %v614 = vrot.slane %v612, 1
        %v615 = vor.u32 %v610, %v614
        %v617 = vshll.u32 %v460, 16
        %v619 = vrot.slane %v617, 1
        %v620 = vsel %vm464, %v615, %v619
        %v622 = vshrl.u32 %v413, 16
        %v624 = vshll.u32 %v413, 16
        %v626 = vrot.slane %v624, 1
        %v627 = vor.u32 %v622, %v626
        %v629 = vshll.u32 %v461, 16
        %v631 = vrot.slane %v629, 1
        %v632 = vsel %vm464, %v627, %v631
        %v634 = vshrl.u32 %v414, 16
        %v636 = vshll.u32 %v414, 16
        %v638 = vrot.slane %v636, 1
        %v639 = vor.u32 %v634, %v638
        %v641 = vshll.u32 %v462, 16
        %v643 = vrot.slane %v641, 1
        %v644 = vsel %vm464, %v639, %v643
        %v646 = vshrl.u32 %v415, 16
        %v648 = vshll.u32 %v415, 16
        %v650 = vrot.slane %v648, 1
        %v651 = vor.u32 %v646, %v650
        %v653 = vshll.u32 %v463, 16
        %v655 = vrot.slane %v653, 1
        %v656 = vsel %vm464, %v651, %v655
        %657 = vrot.lane.b32.xlu0 %v476, 4
        %v658 = vpop.permute.xlu0 %657
        %659 = vrot.lane.b32.xlu0 %v488, 4
        %v660 = vpop.permute.xlu0 %659
        %661 = vrot.lane.b32.xlu0 %v500, 4
        %v662 = vpop.permute.xlu0 %661
        %663 = vrot.lane.b32.xlu0 %v512, 4
        %v664 = vpop.permute.xlu0 %663
        %665 = vrot.lane.b32.xlu0 %v524, 4
        %v666 = vpop.permute.xlu0 %665
        %667 = vrot.lane.b32.xlu0 %v536, 4
        %v668 = vpop.permute.xlu0 %667
        %669 = vrot.lane.b32.xlu0 %v548, 4
        %v670 = vpop.permute.xlu0 %669
        %671 = vrot.lane.b32.xlu0 %v560, 4
        %v672 = vpop.permute.xlu0 %671
        %673 = vrot.lane.b32.xlu0 %v572, 4
        %v674 = vpop.permute.xlu0 %673
        %675 = vrot.lane.b32.xlu0 %v584, 4
        %v676 = vpop.permute.xlu0 %675
        %677 = vrot.lane.b32.xlu0 %v596, 4
        %v678 = vpop.permute.xlu0 %677
        %679 = vrot.lane.b32.xlu0 %v608, 4
        %v680 = vpop.permute.xlu0 %679
        %681 = vrot.lane.b32.xlu0 %v620, 4
        %v682 = vpop.permute.xlu0 %681
        %683 = vrot.lane.b32.xlu0 %v632, 4
        %v684 = vpop.permute.xlu0 %683
        %685 = vrot.lane.b32.xlu0 %v644, 4
        %v686 = vpop.permute.xlu0 %685
        %687 = vrot.lane.b32.xlu0 %v656, 4
        %v688 = vpop.permute.xlu0 %687
        %v721 = vunpack.c.l.b16 %v288
        %v722 = vunpack.c.l.b16 %v289
        %v723 = vunpack.c.l.b16 %v291
        %v724 = vunpack.c.l.b16 %v292
        %v725 = vunpack.c.l.b16 %v294
        %v726 = vunpack.c.l.b16 %v295
        %v727 = vunpack.c.l.b16 %v297
        %v728 = vunpack.c.l.b16 %v298
        %v729 = vunpack.c.l.b16 %v300
        %v730 = vunpack.c.l.b16 %v301
        %v731 = vunpack.c.l.b16 %v303
        %v732 = vunpack.c.l.b16 %v304
        %v733 = vunpack.c.l.b16 %v306
        %v734 = vunpack.c.l.b16 %v307
        %v735 = vunpack.c.l.b16 %v309
        %v736 = vunpack.c.l.b16 %v310
        %v737 = vunpack.c.l.b16 %v312
        %v738 = vunpack.c.l.b16 %v313
        %v739 = vunpack.c.l.b16 %v315
        %v740 = vunpack.c.l.b16 %v316
        %v741 = vunpack.c.l.b16 %v318
        %v742 = vunpack.c.l.b16 %v319
        %v743 = vunpack.c.l.b16 %v321
        %v744 = vunpack.c.l.b16 %v322
        %v745 = vunpack.c.l.b16 %v324
        %v746 = vunpack.c.l.b16 %v325
        %v747 = vunpack.c.l.b16 %v327
        %v748 = vunpack.c.l.b16 %v328
        %v749 = vunpack.c.l.b16 %v330
        %v750 = vunpack.c.l.b16 %v331
        %v751 = vunpack.c.l.b16 %v333
        %v752 = vunpack.c.l.b16 %v334
        %v753 = vpack.c.b16 %v722, %v721
        %v754 = vpack.c.b16 %v724, %v723
        %v755 = vpack.c.b16 %v726, %v725
        %v756 = vpack.c.b16 %v728, %v727
        %v757 = vpack.c.b16 %v730, %v729
        %v758 = vpack.c.b16 %v732, %v731
        %v759 = vpack.c.b16 %v734, %v733
        %v760 = vpack.c.b16 %v736, %v735
        %v761 = vpack.c.b16 %v738, %v737
        %v762 = vpack.c.b16 %v740, %v739
        %v763 = vpack.c.b16 %v742, %v741
        %v764 = vpack.c.b16 %v744, %v743
        %v765 = vpack.c.b16 %v746, %v745
        %v766 = vpack.c.b16 %v748, %v747
        %v767 = vpack.c.b16 %v750, %v749
        %v768 = vpack.c.b16 %v752, %v751
        %769 = vrot.lane.b32.xlu0 %v753, 8
        %v770 = vpop.permute.xlu0 %769
        %771 = vrot.lane.b32.xlu0 %v754, 8
        %v772 = vpop.permute.xlu0 %771
        %773 = vrot.lane.b32.xlu0 %v755, 8
        %v774 = vpop.permute.xlu0 %773
        %775 = vrot.lane.b32.xlu0 %v756, 8
        %v776 = vpop.permute.xlu0 %775
        %777 = vrot.lane.b32.xlu0 %v757, 8
        %v778 = vpop.permute.xlu0 %777
        %779 = vrot.lane.b32.xlu0 %v758, 8
        %v780 = vpop.permute.xlu0 %779
        %781 = vrot.lane.b32.xlu0 %v759, 8
        %v782 = vpop.permute.xlu0 %781
        %783 = vrot.lane.b32.xlu0 %v760, 8
        %v784 = vpop.permute.xlu0 %783
        %785 = vrot.lane.b32.xlu0 %v761, 8
        %v786 = vpop.permute.xlu0 %785
        %787 = vrot.lane.b32.xlu0 %v762, 8
        %v788 = vpop.permute.xlu0 %787
        %789 = vrot.lane.b32.xlu0 %v763, 8
        %v790 = vpop.permute.xlu0 %789
        %791 = vrot.lane.b32.xlu0 %v764, 8
        %v792 = vpop.permute.xlu0 %791
        %793 = vrot.lane.b32.xlu0 %v765, 8
        %v794 = vpop.permute.xlu0 %793
        %795 = vrot.lane.b32.xlu0 %v766, 8
        %v796 = vpop.permute.xlu0 %795
        %797 = vrot.lane.b32.xlu0 %v767, 8
        %v798 = vpop.permute.xlu0 %797
        %799 = vrot.lane.b32.xlu0 %v768, 8
        %v800 = vpop.permute.xlu0 %799
        %v817 = vunpack.c.l.b16 %v290
        %v818 = vunpack.c.l.b16 %v293
        %v819 = vunpack.c.l.b16 %v296
        %v820 = vunpack.c.l.b16 %v299
        %v821 = vunpack.c.l.b16 %v302
        %v822 = vunpack.c.l.b16 %v305
        %v823 = vunpack.c.l.b16 %v308
        %v824 = vunpack.c.l.b16 %v311
        %v825 = vunpack.c.l.b16 %v314
        %v826 = vunpack.c.l.b16 %v317
        %v827 = vunpack.c.l.b16 %v320
        %v828 = vunpack.c.l.b16 %v323
        %v829 = vunpack.c.l.b16 %v326
        %v830 = vunpack.c.l.b16 %v329
        %v831 = vunpack.c.l.b16 %v332
        %v832 = vunpack.c.l.b16 %v335
        %v833 = vpack.c.b16 %v817, %v817
        %v834 = vpack.c.b16 %v818, %v818
        %v835 = vpack.c.b16 %v819, %v819
        %v836 = vpack.c.b16 %v820, %v820
        %v837 = vpack.c.b16 %v821, %v821
        %v838 = vpack.c.b16 %v822, %v822
        %v839 = vpack.c.b16 %v823, %v823
        %v840 = vpack.c.b16 %v824, %v824
        %v841 = vpack.c.b16 %v825, %v825
        %v842 = vpack.c.b16 %v826, %v826
        %v843 = vpack.c.b16 %v827, %v827
        %v844 = vpack.c.b16 %v828, %v828
        %v845 = vpack.c.b16 %v829, %v829
        %v846 = vpack.c.b16 %v830, %v830
        %v847 = vpack.c.b16 %v831, %v831
        %v848 = vpack.c.b16 %v832, %v832
        %v850 = vshrl.u32 %v753, 16
        %v852 = vshll.u32 %v753, 16
        %v854 = vrot.slane %v852, 1
        %v855 = vor.u32 %v850, %v854
        %v857 = vshll.u32 %v833, 16
        %v859 = vrot.slane %v857, 1
        %v860 = vsel %vm464, %v855, %v859
        %v862 = vshrl.u32 %v754, 16
        %v864 = vshll.u32 %v754, 16
        %v866 = vrot.slane %v864, 1
        %v867 = vor.u32 %v862, %v866
        %v869 = vshll.u32 %v834, 16
        %v871 = vrot.slane %v869, 1
        %v872 = vsel %vm464, %v867, %v871
        %v874 = vshrl.u32 %v755, 16
        %v876 = vshll.u32 %v755, 16
        %v878 = vrot.slane %v876, 1
        %v879 = vor.u32 %v874, %v878
        %v881 = vshll.u32 %v835, 16
        %v883 = vrot.slane %v881, 1
        %v884 = vsel %vm464, %v879, %v883
        %v886 = vshrl.u32 %v756, 16
        %v888 = vshll.u32 %v756, 16
        %v890 = vrot.slane %v888, 1
        %v891 = vor.u32 %v886, %v890
        %v893 = vshll.u32 %v836, 16
        %v895 = vrot.slane %v893, 1
        %v896 = vsel %vm464, %v891, %v895
        %v898 = vshrl.u32 %v757, 16
        %v900 = vshll.u32 %v757, 16
        %v902 = vrot.slane %v900, 1
        %v903 = vor.u32 %v898, %v902
        %v905 = vshll.u32 %v837, 16
        %v907 = vrot.slane %v905, 1
        %v908 = vsel %vm464, %v903, %v907
        %v910 = vshrl.u32 %v758, 16
        %v912 = vshll.u32 %v758, 16
        %v914 = vrot.slane %v912, 1
        %v915 = vor.u32 %v910, %v914
        %v917 = vshll.u32 %v838, 16
        %v919 = vrot.slane %v917, 1
        %v920 = vsel %vm464, %v915, %v919
        %v922 = vshrl.u32 %v759, 16
        %v924 = vshll.u32 %v759, 16
        %v926 = vrot.slane %v924, 1
        %v927 = vor.u32 %v922, %v926
        %v929 = vshll.u32 %v839, 16
        %v931 = vrot.slane %v929, 1
        %v932 = vsel %vm464, %v927, %v931
        %v934 = vshrl.u32 %v760, 16
        %v936 = vshll.u32 %v760, 16
        %v938 = vrot.slane %v936, 1
        %v939 = vor.u32 %v934, %v938
        %v941 = vshll.u32 %v840, 16
        %v943 = vrot.slane %v941, 1
        %v944 = vsel %vm464, %v939, %v943
        %v946 = vshrl.u32 %v761, 16
        %v948 = vshll.u32 %v761, 16
        %v950 = vrot.slane %v948, 1
        %v951 = vor.u32 %v946, %v950
        %v953 = vshll.u32 %v841, 16
        %v955 = vrot.slane %v953, 1
        %v956 = vsel %vm464, %v951, %v955
        %v958 = vshrl.u32 %v762, 16
        %v960 = vshll.u32 %v762, 16
        %v962 = vrot.slane %v960, 1
        %v963 = vor.u32 %v958, %v962
        %v965 = vshll.u32 %v842, 16
        %v967 = vrot.slane %v965, 1
        %v968 = vsel %vm464, %v963, %v967
        %v970 = vshrl.u32 %v763, 16
        %v972 = vshll.u32 %v763, 16
        %v974 = vrot.slane %v972, 1
        %v975 = vor.u32 %v970, %v974
        %v977 = vshll.u32 %v843, 16
        %v979 = vrot.slane %v977, 1
        %v980 = vsel %vm464, %v975, %v979
        %v982 = vshrl.u32 %v764, 16
        %v984 = vshll.u32 %v764, 16
        %v986 = vrot.slane %v984, 1
        %v987 = vor.u32 %v982, %v986
        %v989 = vshll.u32 %v844, 16
        %v991 = vrot.slane %v989, 1
        %v992 = vsel %vm464, %v987, %v991
        %v994 = vshrl.u32 %v765, 16
        %v996 = vshll.u32 %v765, 16
        %v998 = vrot.slane %v996, 1
        %v999 = vor.u32 %v994, %v998
        %v1001 = vshll.u32 %v845, 16
        %v1003 = vrot.slane %v1001, 1
        %v1004 = vsel %vm464, %v999, %v1003
        %v1006 = vshrl.u32 %v766, 16
        %v1008 = vshll.u32 %v766, 16
        %v1010 = vrot.slane %v1008, 1
        %v1011 = vor.u32 %v1006, %v1010
        %v1013 = vshll.u32 %v846, 16
        %v1015 = vrot.slane %v1013, 1
        %v1016 = vsel %vm464, %v1011, %v1015
        %v1018 = vshrl.u32 %v767, 16
        %v1020 = vshll.u32 %v767, 16
        %v1022 = vrot.slane %v1020, 1
        %v1023 = vor.u32 %v1018, %v1022
        %v1025 = vshll.u32 %v847, 16
        %v1027 = vrot.slane %v1025, 1
        %v1028 = vsel %vm464, %v1023, %v1027
        %v1030 = vshrl.u32 %v768, 16
        %v1032 = vshll.u32 %v768, 16
        %v1034 = vrot.slane %v1032, 1
        %v1035 = vor.u32 %v1030, %v1034
        %v1037 = vshll.u32 %v848, 16
        %v1039 = vrot.slane %v1037, 1
        %v1040 = vsel %vm464, %v1035, %v1039
        %1041 = vrot.lane.b32.xlu0 %v860, 12
        %v1042 = vpop.permute.xlu0 %1041
        %1043 = vrot.lane.b32.xlu0 %v872, 12
        %v1044 = vpop.permute.xlu0 %1043
        %1045 = vrot.lane.b32.xlu0 %v884, 12
        %v1046 = vpop.permute.xlu0 %1045
        %1047 = vrot.lane.b32.xlu0 %v896, 12
        %v1048 = vpop.permute.xlu0 %1047
        %1049 = vrot.lane.b32.xlu0 %v908, 12
        %v1050 = vpop.permute.xlu0 %1049
        %1051 = vrot.lane.b32.xlu0 %v920, 12
        %v1052 = vpop.permute.xlu0 %1051
        %1053 = vrot.lane.b32.xlu0 %v932, 12
        %v1054 = vpop.permute.xlu0 %1053
        %1055 = vrot.lane.b32.xlu0 %v944, 12
        %v1056 = vpop.permute.xlu0 %1055
        %1057 = vrot.lane.b32.xlu0 %v956, 12
        %v1058 = vpop.permute.xlu0 %1057
        %1059 = vrot.lane.b32.xlu0 %v968, 12
        %v1060 = vpop.permute.xlu0 %1059
        %1061 = vrot.lane.b32.xlu0 %v980, 12
        %v1062 = vpop.permute.xlu0 %1061
        %1063 = vrot.lane.b32.xlu0 %v992, 12
        %v1064 = vpop.permute.xlu0 %1063
        %1065 = vrot.lane.b32.xlu0 %v1004, 12
        %v1066 = vpop.permute.xlu0 %1065
        %1067 = vrot.lane.b32.xlu0 %v1016, 12
        %v1068 = vpop.permute.xlu0 %1067
        %1069 = vrot.lane.b32.xlu0 %v1028, 12
        %v1070 = vpop.permute.xlu0 %1069
        %1071 = vrot.lane.b32.xlu0 %v1040, 12
        %v1072 = vpop.permute.xlu0 %1071
        %vm1073 = vcmask 31744
        %v1075 = vsel %vm1073, %v400, %v658
        %v1077 = vsel %vm1073, %v401, %v660
        %v1079 = vsel %vm1073, %v402, %v662
        %v1081 = vsel %vm1073, %v403, %v664
        %v1083 = vsel %vm1073, %v404, %v666
        %v1085 = vsel %vm1073, %v405, %v668
        %v1087 = vsel %vm1073, %v406, %v670
        %v1089 = vsel %vm1073, %v407, %v672
        %v1091 = vsel %vm1073, %v408, %v674
        %v1093 = vsel %vm1073, %v409, %v676
        %v1095 = vsel %vm1073, %v410, %v678
        %v1097 = vsel %vm1073, %v411, %v680
        %v1099 = vsel %vm1073, %v412, %v682
        %v1101 = vsel %vm1073, %v413, %v684
        %v1103 = vsel %vm1073, %v414, %v686
        %v1105 = vsel %vm1073, %v415, %v688
        %vm1106 = vcmask 64512
        %v1108 = vsel %vm1106, %v1075, %v770
        %v1110 = vsel %vm1106, %v1077, %v772
        %v1112 = vsel %vm1106, %v1079, %v774
        %v1114 = vsel %vm1106, %v1081, %v776
        %v1116 = vsel %vm1106, %v1083, %v778
        %v1118 = vsel %vm1106, %v1085, %v780
        %v1120 = vsel %vm1106, %v1087, %v782
        %v1122 = vsel %vm1106, %v1089, %v784
        %v1124 = vsel %vm1106, %v1091, %v786
        %v1126 = vsel %vm1106, %v1093, %v788
        %v1128 = vsel %vm1106, %v1095, %v790
        %v1130 = vsel %vm1106, %v1097, %v792
        %v1132 = vsel %vm1106, %v1099, %v794
        %v1134 = vsel %vm1106, %v1101, %v796
        %v1136 = vsel %vm1106, %v1103, %v798
        %v1138 = vsel %vm1106, %v1105, %v800
        %vm1139 = vcmask 97280
        %v1141 = vsel %vm1139, %v1108, %v1042
        %v1143 = vsel %vm1139, %v1110, %v1044
        %v1145 = vsel %vm1139, %v1112, %v1046
        %v1147 = vsel %vm1139, %v1114, %v1048
        %v1149 = vsel %vm1139, %v1116, %v1050
        %v1151 = vsel %vm1139, %v1118, %v1052
        %v1153 = vsel %vm1139, %v1120, %v1054
        %v1155 = vsel %vm1139, %v1122, %v1056
        %v1157 = vsel %vm1139, %v1124, %v1058
        %v1159 = vsel %vm1139, %v1126, %v1060
        %v1161 = vsel %vm1139, %v1128, %v1062
        %v1163 = vsel %vm1139, %v1130, %v1064
        %v1165 = vsel %vm1139, %v1132, %v1066
        %v1167 = vsel %vm1139, %v1134, %v1068
        %v1169 = vsel %vm1139, %v1136, %v1070
        %v1171 = vsel %vm1139, %v1138, %v1072
        %v1172 = vld [vmem:[%s229] sm:$0xf]
        %v1173 = vld [vmem:[%s229 + $0x4] sm:$0xf]
        %v1176 = vunpack.c.l.b16 %v1172
        %v1177 = vunpack.c.l.b16 %v1173
        %v1178 = vpack.c.b16 %v1177, %v1176
        %vm1180 = vcmask 130048
        %v1181 = vsel %vm1180, %v1141, 0
        %v1183 = vsel %vm1180, %v1143, 0
        %v1185 = vsel %vm1180, %v1145, 0
        %v1187 = vsel %vm1180, %v1147, 0
        %v1189 = vsel %vm1180, %v1149, 0
        %v1191 = vsel %vm1180, %v1151, 0
        %v1193 = vsel %vm1180, %v1153, 0
        %v1195 = vsel %vm1180, %v1155, 0
        %v1197 = vsel %vm1180, %v1157, 0
        %v1199 = vsel %vm1180, %v1159, 0
        %v1201 = vsel %vm1180, %v1161, 0
        %v1203 = vsel %vm1180, %v1163, 0
        %v1205 = vsel %vm1180, %v1165, 0
        %v1207 = vsel %vm1180, %v1167, 0
        %v1209 = vsel %vm1180, %v1169, 0
        %v1211 = vsel %vm1180, %v1171, 0
        %1213 = vmatprep.subr.bf16.mxu0 0
        %1214 = vmatpush1.bf16.msra.mxu0 %v1178
        %1215 = vmatprep.subr.bf16.mxu0 0
        %1216 = vmatpush1.bf16.msra.mxu0 0
        %1217 = vmatprep.subr.bf16.mxu0 0
        %1218 = vmatpush1.bf16.msra.mxu0 0
        %1219 = vmatprep.subr.bf16.mxu0 0
        %1220 = vmatpush1.bf16.msra.mxu0 0
        %1221 = vmatprep.subr.bf16.mxu0 0
        %1222 = vmatpush1.bf16.msra.mxu0 0
        %1223 = vmatprep.subr.bf16.mxu0 0
        %1224 = vmatpush1.bf16.msra.mxu0 0
        %1225 = vmatprep.subr.bf16.mxu0 0
        %1226 = vmatpush1.bf16.msra.mxu0 0
        %1227 = vmatprep.subr.bf16.mxu0 0
        %1228 = vmatpush1.bf16.msra.mxu0 0
        %1229 = vmatprep.subr.bf16.mxu0 0
        %1230 = vmatpush1.bf16.msra.mxu0 0
        %1231 = vmatprep.subr.bf16.mxu0 0
        %1232 = vmatpush1.bf16.msra.mxu0 0
        %1233 = vmatprep.subr.bf16.mxu0 0
        %1234 = vmatpush1.bf16.msra.mxu0 0
        %1235 = vmatprep.subr.bf16.mxu0 0
        %1236 = vmatpush1.bf16.msra.mxu0 0
        %1237 = vmatprep.subr.bf16.mxu0 0
        %1238 = vmatpush1.bf16.msra.mxu0 0
        %1239 = vmatprep.subr.bf16.mxu0 0
        %1240 = vmatpush1.bf16.msra.mxu0 0
        %1241 = vmatprep.subr.bf16.mxu0 0
        %1242 = vmatpush1.bf16.msra.mxu0 0
        %1243 = vmatprep.subr.bf16.mxu0 0
        %1244 = vmatpush1.bf16.msra.mxu0 0
        %1245 = vmatprep.mubr.bf16.mxu0 0
        %1246 = vmatmul.mubr.bf16.gmra.mrb[0].mxu0 %v1181
        %v1247 = vpop.f32.mrb[0].mxu0
        %v1248 = vadd.f32 0.0, %v1247
        %v1249 = vpop.f32.mrb[0].mxu0
        %v1250 = vpop.f32.mrb[0].mxu0
        %v1251 = vadd.f32 0.0, %v1250
        %v1252 = vpop.f32.mrb[0].mxu0
        %1253 = vmatprep.mubr.bf16.mxu0 0
        %1254 = vmatmul.mubr.bf16.gmra.mrb[0].mxu0 %v1183
        %v1255 = vpop.f32.mrb[0].mxu0
        %v1256 = vadd.f32 0.0, %v1255
        %v1257 = vpop.f32.mrb[0].mxu0
        %v1258 = vpop.f32.mrb[0].mxu0
        %v1259 = vadd.f32 0.0, %v1258
        %v1260 = vpop.f32.mrb[0].mxu0
        %1261 = vmatprep.mubr.bf16.mxu0 0
        %1262 = vmatmul.mubr.bf16.gmra.mrb[0].mxu0 %v1185
        %v1263 = vpop.f32.mrb[0].mxu0
        %v1264 = vadd.f32 0.0, %v1263
        %v1265 = vpop.f32.mrb[0].mxu0
        %v1266 = vpop.f32.mrb[0].mxu0
        %v1267 = vadd.f32 0.0, %v1266
        %v1268 = vpop.f32.mrb[0].mxu0
        %1269 = vmatprep.mubr.bf16.mxu0 0
        %1270 = vmatmul.mubr.bf16.gmra.mrb[0].mxu0 %v1187
        %v1271 = vpop.f32.mrb[0].mxu0
        %v1272 = vadd.f32 0.0, %v1271
        %v1273 = vpop.f32.mrb[0].mxu0
        %v1274 = vpop.f32.mrb[0].mxu0
        %v1275 = vadd.f32 0.0, %v1274
        %v1276 = vpop.f32.mrb[0].mxu0
        %1277 = vmatprep.mubr.bf16.mxu0 0
        %1278 = vmatmul.mubr.bf16.gmra.mrb[0].mxu0 %v1189
        %v1279 = vpop.f32.mrb[0].mxu0
        %v1280 = vadd.f32 0.0, %v1279
        %v1281 = vpop.f32.mrb[0].mxu0
        %v1282 = vpop.f32.mrb[0].mxu0
        %v1283 = vadd.f32 0.0, %v1282
        %v1284 = vpop.f32.mrb[0].mxu0
        %1285 = vmatprep.mubr.bf16.mxu0 0
        %1286 = vmatmul.mubr.bf16.gmra.mrb[0].mxu0 %v1191
        %v1287 = vpop.f32.mrb[0].mxu0
        %v1288 = vadd.f32 0.0, %v1287
        %v1289 = vpop.f32.mrb[0].mxu0
        %v1290 = vpop.f32.mrb[0].mxu0
        %v1291 = vadd.f32 0.0, %v1290
        %v1292 = vpop.f32.mrb[0].mxu0
        %1293 = vmatprep.mubr.bf16.mxu0 0
        %1294 = vmatmul.mubr.bf16.gmra.mrb[0].mxu0 %v1193
        %v1295 = vpop.f32.mrb[0].mxu0
        %v1296 = vadd.f32 0.0, %v1295
        %v1297 = vpop.f32.mrb[0].mxu0
        %v1298 = vpop.f32.mrb[0].mxu0
        %v1299 = vadd.f32 0.0, %v1298
        %v1300 = vpop.f32.mrb[0].mxu0
        %1301 = vmatprep.mubr.bf16.mxu0 0
        %1302 = vmatmul.mubr.bf16.gmra.mrb[0].mxu0 %v1195
        %v1303 = vpop.f32.mrb[0].mxu0
        %v1304 = vadd.f32 0.0, %v1303
        %v1305 = vpop.f32.mrb[0].mxu0
        %v1306 = vpop.f32.mrb[0].mxu0
        %v1307 = vadd.f32 0.0, %v1306
        %v1308 = vpop.f32.mrb[0].mxu0
        %1309 = vmatprep.mubr.bf16.mxu0 0
        %1310 = vmatmul.mubr.bf16.gmra.mrb[0].mxu0 %v1197
        %v1311 = vpop.f32.mrb[0].mxu0
        %v1312 = vadd.f32 0.0, %v1311
        %v1313 = vpop.f32.mrb[0].mxu0
        %v1314 = vpop.f32.mrb[0].mxu0
        %v1315 = vadd.f32 0.0, %v1314
        %v1316 = vpop.f32.mrb[0].mxu0
        %1317 = vmatprep.mubr.bf16.mxu0 0
        %1318 = vmatmul.mubr.bf16.gmra.mrb[0].mxu0 %v1199
        %v1319 = vpop.f32.mrb[0].mxu0
        %v1320 = vadd.f32 0.0, %v1319
        %v1321 = vpop.f32.mrb[0].mxu0
        %v1322 = vpop.f32.mrb[0].mxu0
        %v1323 = vadd.f32 0.0, %v1322
        %v1324 = vpop.f32.mrb[0].mxu0
        %1325 = vmatprep.mubr.bf16.mxu0 0
        %1326 = vmatmul.mubr.bf16.gmra.mrb[0].mxu0 %v1201
        %v1327 = vpop.f32.mrb[0].mxu0
        %v1328 = vadd.f32 0.0, %v1327
        %v1329 = vpop.f32.mrb[0].mxu0
        %v1330 = vpop.f32.mrb[0].mxu0
        %v1331 = vadd.f32 0.0, %v1330
        %v1332 = vpop.f32.mrb[0].mxu0
        %1333 = vmatprep.mubr.bf16.mxu0 0
        %1334 = vmatmul.mubr.bf16.gmra.mrb[0].mxu0 %v1203
        %v1335 = vpop.f32.mrb[0].mxu0
        %v1336 = vadd.f32 0.0, %v1335
        %v1337 = vpop.f32.mrb[0].mxu0
        %v1338 = vpop.f32.mrb[0].mxu0
        %v1339 = vadd.f32 0.0, %v1338
        %v1340 = vpop.f32.mrb[0].mxu0
        %1341 = vmatprep.mubr.bf16.mxu0 0
        %1342 = vmatmul.mubr.bf16.gmra.mrb[0].mxu0 %v1205
        %v1343 = vpop.f32.mrb[0].mxu0
        %v1344 = vadd.f32 0.0, %v1343
        %v1345 = vpop.f32.mrb[0].mxu0
        %v1346 = vpop.f32.mrb[0].mxu0
        %v1347 = vadd.f32 0.0, %v1346
        %v1348 = vpop.f32.mrb[0].mxu0
        %1349 = vmatprep.mubr.bf16.mxu0 0
        %1350 = vmatmul.mubr.bf16.gmra.mrb[0].mxu0 %v1207
        %v1351 = vpop.f32.mrb[0].mxu0
        %v1352 = vadd.f32 0.0, %v1351
        %v1353 = vpop.f32.mrb[0].mxu0
        %v1354 = vpop.f32.mrb[0].mxu0
        %v1355 = vadd.f32 0.0, %v1354
        %v1356 = vpop.f32.mrb[0].mxu0
        %1357 = vmatprep.mubr.bf16.mxu0 0
        %1358 = vmatmul.mubr.bf16.gmra.mrb[0].mxu0 %v1209
        %v1359 = vpop.f32.mrb[0].mxu0
        %v1360 = vadd.f32 0.0, %v1359
        %v1361 = vpop.f32.mrb[0].mxu0
        %v1362 = vpop.f32.mrb[0].mxu0
        %v1363 = vadd.f32 0.0, %v1362
        %v1364 = vpop.f32.mrb[0].mxu0
        %1365 = vmatprep.mubr.bf16.mxu0 0
        %1366 = vmatmul.mubr.bf16.gmra.mrb[0].mxu0 %v1211
        %v1367 = vpop.f32.mrb[0].mxu0
        %v1368 = vadd.f32 0.0, %v1367
        %v1369 = vpop.f32.mrb[0].mxu0
        %v1370 = vpop.f32.mrb[0].mxu0
        %v1371 = vadd.f32 0.0, %v1370
        %v1372 = vpop.f32.mrb[0].mxu0
        %1373 = vdwg.mxu0
        %v1390 = vrot.slane %v1256, 7
        %vm1391 = vcmask 1041409
        %v1392 = vsel %vm1391, %v1390, %v1248
        %v1393 = vrot.slane %v1264, 6
        %vm1394 = vcmask 1042434
        %v1395 = vsel %vm1394, %v1393, %v1392
        %v1396 = vrot.slane %v1272, 5
        %vm1397 = vcmask 1043459
        %v1398 = vsel %vm1397, %v1396, %v1395
        %v1399 = vrot.slane %v1280, 4
        %vm1400 = vcmask 1044484
        %v1401 = vsel %vm1400, %v1399, %v1398
        %v1402 = vrot.slane %v1288, 3
        %vm1403 = vcmask 1045509
        %v1404 = vsel %vm1403, %v1402, %v1401
        %v1405 = vrot.slane %v1296, 2
        %vm1406 = vcmask 1046534
        %v1407 = vsel %vm1406, %v1405, %v1404
        %v1408 = vrot.slane %v1304, 1
        %vm1409 = vcmask 1047559
        %v1410 = vsel %vm1409, %v1408, %v1407
        %v1411 = vrot.slane %v1320, 7
        %v1412 = vsel %vm1391, %v1411, %v1312
        %v1413 = vrot.slane %v1328, 6
        %v1414 = vsel %vm1394, %v1413, %v1412
        %v1415 = vrot.slane %v1336, 5
        %v1416 = vsel %vm1397, %v1415, %v1414
        %v1417 = vrot.slane %v1344, 4
        %v1418 = vsel %vm1400, %v1417, %v1416
        %v1419 = vrot.slane %v1352, 3
        %v1420 = vsel %vm1403, %v1419, %v1418
        %v1421 = vrot.slane %v1360, 2
        %v1422 = vsel %vm1406, %v1421, %v1420
        %v1423 = vrot.slane %v1368, 1
        %v1424 = vsel %vm1409, %v1423, %v1422
        %v1427 = vrot.slane %v1248, 1
        %v1428 = vsel %vm1391, %v1256, %v1427
        %v1429 = vrot.slane %v1264, 7
        %v1430 = vsel %vm1394, %v1429, %v1428
        %v1431 = vrot.slane %v1272, 6
        %v1432 = vsel %vm1397, %v1431, %v1430
        %v1433 = vrot.slane %v1280, 5
        %v1434 = vsel %vm1400, %v1433, %v1432
        %v1435 = vrot.slane %v1288, 4
        %v1436 = vsel %vm1403, %v1435, %v1434
        %v1437 = vrot.slane %v1296, 3
        %v1438 = vsel %vm1406, %v1437, %v1436
        %v1439 = vrot.slane %v1304, 2
        %v1440 = vsel %vm1409, %v1439, %v1438
        %v1441 = vrot.slane %v1312, 1
        %v1442 = vsel %vm1391, %v1320, %v1441
        %v1443 = vrot.slane %v1328, 7
        %v1444 = vsel %vm1394, %v1443, %v1442
        %v1445 = vrot.slane %v1336, 6
        %v1446 = vsel %vm1397, %v1445, %v1444
        %v1447 = vrot.slane %v1344, 5
        %v1448 = vsel %vm1400, %v1447, %v1446
        %v1449 = vrot.slane %v1352, 4
        %v1450 = vsel %vm1403, %v1449, %v1448
        %v1451 = vrot.slane %v1360, 3
        %v1452 = vsel %vm1406, %v1451, %v1450
        %v1453 = vrot.slane %v1368, 2
        %v1454 = vsel %vm1409, %v1453, %v1452
        %1455 = vrot.lane.b32.xlu0 %v1440, 8
        %v1456 = vpop.permute.xlu0 %1455
        %1457 = vrot.lane.b32.xlu0 %v1454, 8
        %v1458 = vpop.permute.xlu0 %1457
        %v1461 = vrot.slane %v1248, 2
        %v1462 = vrot.slane %v1256, 1
        %v1463 = vsel %vm1391, %v1462, %v1461
        %v1464 = vsel %vm1394, %v1264, %v1463
        %v1465 = vrot.slane %v1272, 7
        %v1466 = vsel %vm1397, %v1465, %v1464
        %v1467 = vrot.slane %v1280, 6
        %v1468 = vsel %vm1400, %v1467, %v1466
        %v1469 = vrot.slane %v1288, 5
        %v1470 = vsel %vm1403, %v1469, %v1468
        %v1471 = vrot.slane %v1296, 4
        %v1472 = vsel %vm1406, %v1471, %v1470
        %v1473 = vrot.slane %v1304, 3
        %v1474 = vsel %vm1409, %v1473, %v1472
        %v1475 = vrot.slane %v1312, 2
        %v1476 = vrot.slane %v1320, 1
        %v1477 = vsel %vm1391, %v1476, %v1475
        %v1478 = vsel %vm1394, %v1328, %v1477
        %v1479 = vrot.slane %v1336, 7
        %v1480 = vsel %vm1397, %v1479, %v1478
        %v1481 = vrot.slane %v1344, 6
        %v1482 = vsel %vm1400, %v1481, %v1480
        %v1483 = vrot.slane %v1352, 5
        %v1484 = vsel %vm1403, %v1483, %v1482
        %v1485 = vrot.slane %v1360, 4
        %v1486 = vsel %vm1406, %v1485, %v1484
        %v1487 = vrot.slane %v1368, 3
        %v1488 = vsel %vm1409, %v1487, %v1486
        %1489 = vrot.lane.b32.xlu0 %v1474, 16
        %v1490 = vpop.permute.xlu0 %1489
        %1491 = vrot.lane.b32.xlu0 %v1488, 16
        %v1492 = vpop.permute.xlu0 %1491
        %v1495 = vrot.slane %v1248, 3
        %v1496 = vrot.slane %v1256, 2
        %v1497 = vsel %vm1391, %v1496, %v1495
        %v1498 = vrot.slane %v1264, 1
        %v1499 = vsel %vm1394, %v1498, %v1497
        %v1500 = vsel %vm1397, %v1272, %v1499
        %v1501 = vrot.slane %v1280, 7
        %v1502 = vsel %vm1400, %v1501, %v1500
        %v1503 = vrot.slane %v1288, 6
        %v1504 = vsel %vm1403, %v1503, %v1502
        %v1505 = vrot.slane %v1296, 5
        %v1506 = vsel %vm1406, %v1505, %v1504
        %v1507 = vrot.slane %v1304, 4
        %v1508 = vsel %vm1409, %v1507, %v1506
        %v1509 = vrot.slane %v1312, 3
        %v1510 = vrot.slane %v1320, 2
        %v1511 = vsel %vm1391, %v1510, %v1509
        %v1512 = vrot.slane %v1328, 1
        %v1513 = vsel %vm1394, %v1512, %v1511
        %v1514 = vsel %vm1397, %v1336, %v1513
        %v1515 = vrot.slane %v1344, 7
        %v1516 = vsel %vm1400, %v1515, %v1514
        %v1517 = vrot.slane %v1352, 6
        %v1518 = vsel %vm1403, %v1517, %v1516
        %v1519 = vrot.slane %v1360, 5
        %v1520 = vsel %vm1406, %v1519, %v1518
        %v1521 = vrot.slane %v1368, 4
        %v1522 = vsel %vm1409, %v1521, %v1520
        %1523 = vrot.lane.b32.xlu0 %v1508, 24
        %v1524 = vpop.permute.xlu0 %1523
        %1525 = vrot.lane.b32.xlu0 %v1522, 24
        %v1526 = vpop.permute.xlu0 %1525
        %v1529 = vrot.slane %v1248, 4
        %v1530 = vrot.slane %v1256, 3
        %v1531 = vsel %vm1391, %v1530, %v1529
        %v1532 = vrot.slane %v1264, 2
        %v1533 = vsel %vm1394, %v1532, %v1531
        %v1534 = vrot.slane %v1272, 1
        %v1535 = vsel %vm1397, %v1534, %v1533
        %v1536 = vsel %vm1400, %v1280, %v1535
        %v1537 = vrot.slane %v1288, 7
        %v1538 = vsel %vm1403, %v1537, %v1536
        %v1539 = vrot.slane %v1296, 6
        %v1540 = vsel %vm1406, %v1539, %v1538
        %v1541 = vrot.slane %v1304, 5
        %v1542 = vsel %vm1409, %v1541, %v1540
        %v1543 = vrot.slane %v1312, 4
        %v1544 = vrot.slane %v1320, 3
        %v1545 = vsel %vm1391, %v1544, %v1543
        %v1546 = vrot.slane %v1328, 2
        %v1547 = vsel %vm1394, %v1546, %v1545
        %v1548 = vrot.slane %v1336, 1
        %v1549 = vsel %vm1397, %v1548, %v1547
        %v1550 = vsel %vm1400, %v1344, %v1549
        %v1551 = vrot.slane %v1352, 7
        %v1552 = vsel %vm1403, %v1551, %v1550
        %v1553 = vrot.slane %v1360, 6
        %v1554 = vsel %vm1406, %v1553, %v1552
        %v1555 = vrot.slane %v1368, 5
        %v1556 = vsel %vm1409, %v1555, %v1554
        %1557 = vrot.lane.b32.xlu0 %v1542, 32
        %v1558 = vpop.permute.xlu0 %1557
        %1559 = vrot.lane.b32.xlu0 %v1556, 32
        %v1560 = vpop.permute.xlu0 %1559
        %v1563 = vrot.slane %v1248, 5
        %v1564 = vrot.slane %v1256, 4
        %v1565 = vsel %vm1391, %v1564, %v1563
        %v1566 = vrot.slane %v1264, 3
        %v1567 = vsel %vm1394, %v1566, %v1565
        %v1568 = vrot.slane %v1272, 2
        %v1569 = vsel %vm1397, %v1568, %v1567
        %v1570 = vrot.slane %v1280, 1
        %v1571 = vsel %vm1400, %v1570, %v1569
        %v1572 = vsel %vm1403, %v1288, %v1571
        %v1573 = vrot.slane %v1296, 7
        %v1574 = vsel %vm1406, %v1573, %v1572
        %v1575 = vrot.slane %v1304, 6
        %v1576 = vsel %vm1409, %v1575, %v1574
        %v1577 = vrot.slane %v1312, 5
        %v1578 = vrot.slane %v1320, 4
        %v1579 = vsel %vm1391, %v1578, %v1577
        %v1580 = vrot.slane %v1328, 3
        %v1581 = vsel %vm1394, %v1580, %v1579
        %v1582 = vrot.slane %v1336, 2
        %v1583 = vsel %vm1397, %v1582, %v1581
        %v1584 = vrot.slane %v1344, 1
        %v1585 = vsel %vm1400, %v1584, %v1583
        %v1586 = vsel %vm1403, %v1352, %v1585
        %v1587 = vrot.slane %v1360, 7
        %v1588 = vsel %vm1406, %v1587, %v1586
        %v1589 = vrot.slane %v1368, 6
        %v1590 = vsel %vm1409, %v1589, %v1588
        %1591 = vrot.lane.b32.xlu0 %v1576, 40
        %v1592 = vpop.permute.xlu0 %1591
        %1593 = vrot.lane.b32.xlu0 %v1590, 40
        %v1594 = vpop.permute.xlu0 %1593
        %v1597 = vrot.slane %v1248, 6
        %v1598 = vrot.slane %v1256, 5
        %v1599 = vsel %vm1391, %v1598, %v1597
        %v1600 = vrot.slane %v1264, 4
        %v1601 = vsel %vm1394, %v1600, %v1599
        %v1602 = vrot.slane %v1272, 3
        %v1603 = vsel %vm1397, %v1602, %v1601
        %v1604 = vrot.slane %v1280, 2
        %v1605 = vsel %vm1400, %v1604, %v1603
        %v1606 = vrot.slane %v1288, 1
        %v1607 = vsel %vm1403, %v1606, %v1605
        %v1608 = vsel %vm1406, %v1296, %v1607
        %v1609 = vrot.slane %v1304, 7
        %v1610 = vsel %vm1409, %v1609, %v1608
        %v1611 = vrot.slane %v1312, 6
        %v1612 = vrot.slane %v1320, 5
        %v1613 = vsel %vm1391, %v1612, %v1611
        %v1614 = vrot.slane %v1328, 4
        %v1615 = vsel %vm1394, %v1614, %v1613
        %v1616 = vrot.slane %v1336, 3
        %v1617 = vsel %vm1397, %v1616, %v1615
        %v1618 = vrot.slane %v1344, 2
        %v1619 = vsel %vm1400, %v1618, %v1617
        %v1620 = vrot.slane %v1352, 1
        %v1621 = vsel %vm1403, %v1620, %v1619
        %v1622 = vsel %vm1406, %v1360, %v1621
        %v1623 = vrot.slane %v1368, 7
        %v1624 = vsel %vm1409, %v1623, %v1622
        %1625 = vrot.lane.b32.xlu0 %v1610, 48
        %v1626 = vpop.permute.xlu0 %1625
        %1627 = vrot.lane.b32.xlu0 %v1624, 48
        %v1628 = vpop.permute.xlu0 %1627
        %v1631 = vrot.slane %v1248, 7
        %v1632 = vrot.slane %v1256, 6
        %v1633 = vsel %vm1391, %v1632, %v1631
        %v1634 = vrot.slane %v1264, 5
        %v1635 = vsel %vm1394, %v1634, %v1633
        %v1636 = vrot.slane %v1272, 4
        %v1637 = vsel %vm1397, %v1636, %v1635
        %v1638 = vrot.slane %v1280, 3
        %v1639 = vsel %vm1400, %v1638, %v1637
        %v1640 = vrot.slane %v1288, 2
        %v1641 = vsel %vm1403, %v1640, %v1639
        %v1642 = vrot.slane %v1296, 1
        %v1643 = vsel %vm1406, %v1642, %v1641
        %v1644 = vsel %vm1409, %v1304, %v1643
        %v1645 = vrot.slane %v1312, 7
        %v1646 = vrot.slane %v1320, 6
        %v1647 = vsel %vm1391, %v1646, %v1645
        %v1648 = vrot.slane %v1328, 5
        %v1649 = vsel %vm1394, %v1648, %v1647
        %v1650 = vrot.slane %v1336, 4
        %v1651 = vsel %vm1397, %v1650, %v1649
        %v1652 = vrot.slane %v1344, 3
        %v1653 = vsel %vm1400, %v1652, %v1651
        %v1654 = vrot.slane %v1352, 2
        %v1655 = vsel %vm1403, %v1654, %v1653
        %v1656 = vrot.slane %v1360, 1
        %v1657 = vsel %vm1406, %v1656, %v1655
        %v1658 = vsel %vm1409, %v1368, %v1657
        %1659 = vrot.lane.b32.xlu0 %v1644, 56
        %v1660 = vpop.permute.xlu0 %1659
        %1661 = vrot.lane.b32.xlu0 %v1658, 56
        %v1662 = vpop.permute.xlu0 %1661
        %v1681 = vrot.slane %v1259, 7
        %v1682 = vsel %vm1391, %v1681, %v1251
        %v1683 = vrot.slane %v1267, 6
        %v1684 = vsel %vm1394, %v1683, %v1682
        %v1685 = vrot.slane %v1275, 5
        %v1686 = vsel %vm1397, %v1685, %v1684
        %v1687 = vrot.slane %v1283, 4
        %v1688 = vsel %vm1400, %v1687, %v1686
        %v1689 = vrot.slane %v1291, 3
        %v1690 = vsel %vm1403, %v1689, %v1688
        %v1691 = vrot.slane %v1299, 2
        %v1692 = vsel %vm1406, %v1691, %v1690
        %v1693 = vrot.slane %v1307, 1
        %v1694 = vsel %vm1409, %v1693, %v1692
        %v1695 = vrot.slane %v1323, 7
        %v1696 = vsel %vm1391, %v1695, %v1315
        %v1697 = vrot.slane %v1331, 6
        %v1698 = vsel %vm1394, %v1697, %v1696
        %v1699 = vrot.slane %v1339, 5
        %v1700 = vsel %vm1397, %v1699, %v1698
        %v1701 = vrot.slane %v1347, 4
        %v1702 = vsel %vm1400, %v1701, %v1700
        %v1703 = vrot.slane %v1355, 3
        %v1704 = vsel %vm1403, %v1703, %v1702
        %v1705 = vrot.slane %v1363, 2
        %v1706 = vsel %vm1406, %v1705, %v1704
        %v1707 = vrot.slane %v1371, 1
        %v1708 = vsel %vm1409, %v1707, %v1706
        %1709 = vrot.lane.b32.xlu0 %v1694, 64
        %v1710 = vpop.permute.xlu0 %1709
        %1711 = vrot.lane.b32.xlu0 %v1708, 64
        %v1712 = vpop.permute.xlu0 %1711
        %v1715 = vrot.slane %v1251, 1
        %v1716 = vsel %vm1391, %v1259, %v1715
        %v1717 = vrot.slane %v1267, 7
        %v1718 = vsel %vm1394, %v1717, %v1716
        %v1719 = vrot.slane %v1275, 6
        %v1720 = vsel %vm1397, %v1719, %v1718
        %v1721 = vrot.slane %v1283, 5
        %v1722 = vsel %vm1400, %v1721, %v1720
        %v1723 = vrot.slane %v1291, 4
        %v1724 = vsel %vm1403, %v1723, %v1722
        %v1725 = vrot.slane %v1299, 3
        %v1726 = vsel %vm1406, %v1725, %v1724
        %v1727 = vrot.slane %v1307, 2
        %v1728 = vsel %vm1409, %v1727, %v1726
        %v1729 = vrot.slane %v1315, 1
        %v1730 = vsel %vm1391, %v1323, %v1729
        %v1731 = vrot.slane %v1331, 7
        %v1732 = vsel %vm1394, %v1731, %v1730
        %v1733 = vrot.slane %v1339, 6
        %v1734 = vsel %vm1397, %v1733, %v1732
        %v1735 = vrot.slane %v1347, 5
        %v1736 = vsel %vm1400, %v1735, %v1734
        %v1737 = vrot.slane %v1355, 4
        %v1738 = vsel %vm1403, %v1737, %v1736
        %v1739 = vrot.slane %v1363, 3
        %v1740 = vsel %vm1406, %v1739, %v1738
        %v1741 = vrot.slane %v1371, 2
        %v1742 = vsel %vm1409, %v1741, %v1740
        %1743 = vrot.lane.b32.xlu0 %v1728, 72
        %v1744 = vpop.permute.xlu0 %1743
        %1745 = vrot.lane.b32.xlu0 %v1742, 72
        %v1746 = vpop.permute.xlu0 %1745
        %v1749 = vrot.slane %v1251, 2
        %v1750 = vrot.slane %v1259, 1
        %v1751 = vsel %vm1391, %v1750, %v1749
        %v1752 = vsel %vm1394, %v1267, %v1751
        %v1753 = vrot.slane %v1275, 7
        %v1754 = vsel %vm1397, %v1753, %v1752
        %v1755 = vrot.slane %v1283, 6
        %v1756 = vsel %vm1400, %v1755, %v1754
        %v1757 = vrot.slane %v1291, 5
        %v1758 = vsel %vm1403, %v1757, %v1756
        %v1759 = vrot.slane %v1299, 4
        %v1760 = vsel %vm1406, %v1759, %v1758
        %v1761 = vrot.slane %v1307, 3
        %v1762 = vsel %vm1409, %v1761, %v1760
        %v1763 = vrot.slane %v1315, 2
        %v1764 = vrot.slane %v1323, 1
        %v1765 = vsel %vm1391, %v1764, %v1763
        %v1766 = vsel %vm1394, %v1331, %v1765
        %v1767 = vrot.slane %v1339, 7
        %v1768 = vsel %vm1397, %v1767, %v1766
        %v1769 = vrot.slane %v1347, 6
        %v1770 = vsel %vm1400, %v1769, %v1768
        %v1771 = vrot.slane %v1355, 5
        %v1772 = vsel %vm1403, %v1771, %v1770
        %v1773 = vrot.slane %v1363, 4
        %v1774 = vsel %vm1406, %v1773, %v1772
        %v1775 = vrot.slane %v1371, 3
        %v1776 = vsel %vm1409, %v1775, %v1774
        %1777 = vrot.lane.b32.xlu0 %v1762, 80
        %v1778 = vpop.permute.xlu0 %1777
        %1779 = vrot.lane.b32.xlu0 %v1776, 80
        %v1780 = vpop.permute.xlu0 %1779
        %v1783 = vrot.slane %v1251, 3
        %v1784 = vrot.slane %v1259, 2
        %v1785 = vsel %vm1391, %v1784, %v1783
        %v1786 = vrot.slane %v1267, 1
        %v1787 = vsel %vm1394, %v1786, %v1785
        %v1788 = vsel %vm1397, %v1275, %v1787
        %v1789 = vrot.slane %v1283, 7
        %v1790 = vsel %vm1400, %v1789, %v1788
        %v1791 = vrot.slane %v1291, 6
        %v1792 = vsel %vm1403, %v1791, %v1790
        %v1793 = vrot.slane %v1299, 5
        %v1794 = vsel %vm1406, %v1793, %v1792
        %v1795 = vrot.slane %v1307, 4
        %v1796 = vsel %vm1409, %v1795, %v1794
        %v1797 = vrot.slane %v1315, 3
        %v1798 = vrot.slane %v1323, 2
        %v1799 = vsel %vm1391, %v1798, %v1797
        %v1800 = vrot.slane %v1331, 1
        %v1801 = vsel %vm1394, %v1800, %v1799
        %v1802 = vsel %vm1397, %v1339, %v1801
        %v1803 = vrot.slane %v1347, 7
        %v1804 = vsel %vm1400, %v1803, %v1802
        %v1805 = vrot.slane %v1355, 6
        %v1806 = vsel %vm1403, %v1805, %v1804
        %v1807 = vrot.slane %v1363, 5
        %v1808 = vsel %vm1406, %v1807, %v1806
        %v1809 = vrot.slane %v1371, 4
        %v1810 = vsel %vm1409, %v1809, %v1808
        %1811 = vrot.lane.b32.xlu0 %v1796, 88
        %v1812 = vpop.permute.xlu0 %1811
        %1813 = vrot.lane.b32.xlu0 %v1810, 88
        %v1814 = vpop.permute.xlu0 %1813
        %v1817 = vrot.slane %v1251, 4
        %v1818 = vrot.slane %v1259, 3
        %v1819 = vsel %vm1391, %v1818, %v1817
        %v1820 = vrot.slane %v1267, 2
        %v1821 = vsel %vm1394, %v1820, %v1819
        %v1822 = vrot.slane %v1275, 1
        %v1823 = vsel %vm1397, %v1822, %v1821
        %v1824 = vsel %vm1400, %v1283, %v1823
        %v1825 = vrot.slane %v1291, 7
        %v1826 = vsel %vm1403, %v1825, %v1824
        %v1827 = vrot.slane %v1299, 6
        %v1828 = vsel %vm1406, %v1827, %v1826
        %v1829 = vrot.slane %v1307, 5
        %v1830 = vsel %vm1409, %v1829, %v1828
        %v1831 = vrot.slane %v1315, 4
        %v1832 = vrot.slane %v1323, 3
        %v1833 = vsel %vm1391, %v1832, %v1831
        %v1834 = vrot.slane %v1331, 2
        %v1835 = vsel %vm1394, %v1834, %v1833
        %v1836 = vrot.slane %v1339, 1
        %v1837 = vsel %vm1397, %v1836, %v1835
        %v1838 = vsel %vm1400, %v1347, %v1837
        %v1839 = vrot.slane %v1355, 7
        %v1840 = vsel %vm1403, %v1839, %v1838
        %v1841 = vrot.slane %v1363, 6
        %v1842 = vsel %vm1406, %v1841, %v1840
        %v1843 = vrot.slane %v1371, 5
        %v1844 = vsel %vm1409, %v1843, %v1842
        %1845 = vrot.lane.b32.xlu0 %v1830, 96
        %v1846 = vpop.permute.xlu0 %1845
        %1847 = vrot.lane.b32.xlu0 %v1844, 96
        %v1848 = vpop.permute.xlu0 %1847
        %v1851 = vrot.slane %v1251, 5
        %v1852 = vrot.slane %v1259, 4
        %v1853 = vsel %vm1391, %v1852, %v1851
        %v1854 = vrot.slane %v1267, 3
        %v1855 = vsel %vm1394, %v1854, %v1853
        %v1856 = vrot.slane %v1275, 2
        %v1857 = vsel %vm1397, %v1856, %v1855
        %v1858 = vrot.slane %v1283, 1
        %v1859 = vsel %vm1400, %v1858, %v1857
        %v1860 = vsel %vm1403, %v1291, %v1859
        %v1861 = vrot.slane %v1299, 7
        %v1862 = vsel %vm1406, %v1861, %v1860
        %v1863 = vrot.slane %v1307, 6
        %v1864 = vsel %vm1409, %v1863, %v1862
        %v1865 = vrot.slane %v1315, 5
        %v1866 = vrot.slane %v1323, 4
        %v1867 = vsel %vm1391, %v1866, %v1865
        %v1868 = vrot.slane %v1331, 3
        %v1869 = vsel %vm1394, %v1868, %v1867
        %v1870 = vrot.slane %v1339, 2
        %v1871 = vsel %vm1397, %v1870, %v1869
        %v1872 = vrot.slane %v1347, 1
        %v1873 = vsel %vm1400, %v1872, %v1871
        %v1874 = vsel %vm1403, %v1355, %v1873
        %v1875 = vrot.slane %v1363, 7
        %v1876 = vsel %vm1406, %v1875, %v1874
        %v1877 = vrot.slane %v1371, 6
        %v1878 = vsel %vm1409, %v1877, %v1876
        %1879 = vrot.lane.b32.xlu0 %v1864, 104
        %v1880 = vpop.permute.xlu0 %1879
        %1881 = vrot.lane.b32.xlu0 %v1878, 104
        %v1882 = vpop.permute.xlu0 %1881
        %v1885 = vrot.slane %v1251, 6
        %v1886 = vrot.slane %v1259, 5
        %v1887 = vsel %vm1391, %v1886, %v1885
        %v1888 = vrot.slane %v1267, 4
        %v1889 = vsel %vm1394, %v1888, %v1887
        %v1890 = vrot.slane %v1275, 3
        %v1891 = vsel %vm1397, %v1890, %v1889
        %v1892 = vrot.slane %v1283, 2
        %v1893 = vsel %vm1400, %v1892, %v1891
        %v1894 = vrot.slane %v1291, 1
        %v1895 = vsel %vm1403, %v1894, %v1893
        %v1896 = vsel %vm1406, %v1299, %v1895
        %v1897 = vrot.slane %v1307, 7
        %v1898 = vsel %vm1409, %v1897, %v1896
        %v1899 = vrot.slane %v1315, 6
        %v1900 = vrot.slane %v1323, 5
        %v1901 = vsel %vm1391, %v1900, %v1899
        %v1902 = vrot.slane %v1331, 4
        %v1903 = vsel %vm1394, %v1902, %v1901
        %v1904 = vrot.slane %v1339, 3
        %v1905 = vsel %vm1397, %v1904, %v1903
        %v1906 = vrot.slane %v1347, 2
        %v1907 = vsel %vm1400, %v1906, %v1905
        %v1908 = vrot.slane %v1355, 1
        %v1909 = vsel %vm1403, %v1908, %v1907
        %v1910 = vsel %vm1406, %v1363, %v1909
        %v1911 = vrot.slane %v1371, 7
        %v1912 = vsel %vm1409, %v1911, %v1910
        %1913 = vrot.lane.b32.xlu0 %v1898, 112
        %v1914 = vpop.permute.xlu0 %1913
        %1915 = vrot.lane.b32.xlu0 %v1912, 112
        %v1916 = vpop.permute.xlu0 %1915
        %v1919 = vrot.slane %v1251, 7
        %v1920 = vrot.slane %v1259, 6
        %v1921 = vsel %vm1391, %v1920, %v1919
        %v1922 = vrot.slane %v1267, 5
        %v1923 = vsel %vm1394, %v1922, %v1921
        %v1924 = vrot.slane %v1275, 4
        %v1925 = vsel %vm1397, %v1924, %v1923
        %v1926 = vrot.slane %v1283, 3
        %v1927 = vsel %vm1400, %v1926, %v1925
        %v1928 = vrot.slane %v1291, 2
        %v1929 = vsel %vm1403, %v1928, %v1927
        %v1930 = vrot.slane %v1299, 1
        %v1931 = vsel %vm1406, %v1930, %v1929
        %v1932 = vsel %vm1409, %v1307, %v1931
        %v1933 = vrot.slane %v1315, 7
        %v1934 = vrot.slane %v1323, 6
        %v1935 = vsel %vm1391, %v1934, %v1933
        %v1936 = vrot.slane %v1331, 5
        %v1937 = vsel %vm1394, %v1936, %v1935
        %v1938 = vrot.slane %v1339, 4
        %v1939 = vsel %vm1397, %v1938, %v1937
        %v1940 = vrot.slane %v1347, 3
        %v1941 = vsel %vm1400, %v1940, %v1939
        %v1942 = vrot.slane %v1355, 2
        %v1943 = vsel %vm1403, %v1942, %v1941
        %v1944 = vrot.slane %v1363, 1
        %v1945 = vsel %vm1406, %v1944, %v1943
        %v1946 = vsel %vm1409, %v1371, %v1945
        %1947 = vrot.lane.b32.xlu0 %v1932, 120
        %v1948 = vpop.permute.xlu0 %1947
        %1949 = vrot.lane.b32.xlu0 %v1946, 120
        %v1950 = vpop.permute.xlu0 %1949
        %v1953 = vsel %vm1106, %v1410, %v1456
        %v1954 = vsel %vm1106, %v1424, %v1458
        %v1955 = vsel %vm1180, %v1953, %v1490
        %v1956 = vsel %vm1180, %v1954, %v1492
        %vm1957 = vcmask 195584
        %v1958 = vsel %vm1957, %v1955, %v1524
        %v1959 = vsel %vm1957, %v1956, %v1526
        %vm1960 = vcmask 261120
        %v1961 = vsel %vm1960, %v1958, %v1558
        %v1962 = vsel %vm1960, %v1959, %v1560
        %vm1963 = vcmask 326656
        %v1964 = vsel %vm1963, %v1961, %v1592
        %v1965 = vsel %vm1963, %v1962, %v1594
        %vm1966 = vcmask 392192
        %v1967 = vsel %vm1966, %v1964, %v1626
        %v1968 = vsel %vm1966, %v1965, %v1628
        %vm1969 = vcmask 457728
        %v1970 = vsel %vm1969, %v1967, %v1660
        %v1971 = vsel %vm1969, %v1968, %v1662
        %vm1972 = vcmask 523264
        %v1973 = vsel %vm1972, %v1970, %v1710
        %v1974 = vsel %vm1972, %v1971, %v1712
        %vm1975 = vcmask 588800
        %v1976 = vsel %vm1975, %v1973, %v1744
        %v1977 = vsel %vm1975, %v1974, %v1746
        %vm1978 = vcmask 654336
        %v1979 = vsel %vm1978, %v1976, %v1778
        %v1980 = vsel %vm1978, %v1977, %v1780
        %vm1981 = vcmask 719872
        %v1982 = vsel %vm1981, %v1979, %v1812
        %v1983 = vsel %vm1981, %v1980, %v1814
        %vm1984 = vcmask 785408
        %v1985 = vsel %vm1984, %v1982, %v1846
        %v1986 = vsel %vm1984, %v1983, %v1848
        %vm1987 = vcmask 850944
        %v1988 = vsel %vm1987, %v1985, %v1880
        %v1989 = vsel %vm1987, %v1986, %v1882
        %vm1990 = vcmask 916480
        %v1991 = vsel %vm1990, %v1988, %v1914
        %v1992 = vsel %vm1990, %v1989, %v1916
        %vm1993 = vcmask 982016
        %v1994 = vsel %vm1993, %v1991, %v1948
        %v1995 = vsel %vm1993, %v1992, %v1950
        %v1997 = vlaneseq
        %v1998 = vshrl.u32 %v1997, 7
        %v1999 = vsub.s32 0, %v1998
        %v2000 = vrot.slane %v231, %v1999
        %v2002 = vmul.f32 %v1994, %v2000
        %v2003 = vmul.f32 %v1995, %v2000
        %v2005 = vlaneseq
        %v2006 = vshrl.u32 %v2005, 7
        %v2007 = vsub.s32 0, %v2006
        %v2008 = vrot.slane %v232, %v2007
        %v2010 = vadd.f32 %v2002, %v2008
        %v2011 = vadd.f32 %v2003, %v2008
        %v2012 = vmax.f32 %v2010, 0.0
        %v2013 = vmax.f32 %v2011, 0.0
        %2014 = vst [vmem:[%s219] sm:$0xff] %v2012
        %2015 = vst [vmem:[%s219 + $0x8] sm:$0xff] %v2013
        %v2016 = vshrl.u32 %v448, 16
        %v2018 = vshrl.u32 %v449, 16
        %v2020 = vshrl.u32 %v450, 16
        %v2022 = vshrl.u32 %v451, 16
        %v2024 = vshrl.u32 %v452, 16
        %v2026 = vshrl.u32 %v453, 16
        %v2028 = vshrl.u32 %v454, 16
        %v2030 = vshrl.u32 %v455, 16
        %v2032 = vshrl.u32 %v456, 16
        %v2034 = vshrl.u32 %v457, 16
        %v2036 = vshrl.u32 %v458, 16
        %v2038 = vshrl.u32 %v459, 16
        %v2040 = vshrl.u32 %v460, 16
        %v2042 = vshrl.u32 %v461, 16
        %v2044 = vshrl.u32 %v462, 16
        %v2046 = vshrl.u32 %v463, 16
        %2048 = vrot.lane.b32.xlu0 %v2016, 4
        %v2049 = vpop.permute.xlu0 %2048
        %2050 = vrot.lane.b32.xlu0 %v2018, 4
        %v2051 = vpop.permute.xlu0 %2050
        %2052 = vrot.lane.b32.xlu0 %v2020, 4
        %v2053 = vpop.permute.xlu0 %2052
        %2054 = vrot.lane.b32.xlu0 %v2022, 4
        %v2055 = vpop.permute.xlu0 %2054
        %2056 = vrot.lane.b32.xlu0 %v2024, 4
        %v2057 = vpop.permute.xlu0 %2056
        %2058 = vrot.lane.b32.xlu0 %v2026, 4
        %v2059 = vpop.permute.xlu0 %2058
        %2060 = vrot.lane.b32.xlu0 %v2028, 4
        %v2061 = vpop.permute.xlu0 %2060
        %2062 = vrot.lane.b32.xlu0 %v2030, 4
        %v2063 = vpop.permute.xlu0 %2062
        %2064 = vrot.lane.b32.xlu0 %v2032, 4
        %v2065 = vpop.permute.xlu0 %2064
        %2066 = vrot.lane.b32.xlu0 %v2034, 4
        %v2067 = vpop.permute.xlu0 %2066
        %2068 = vrot.lane.b32.xlu0 %v2036, 4
        %v2069 = vpop.permute.xlu0 %2068
        %2070 = vrot.lane.b32.xlu0 %v2038, 4
        %v2071 = vpop.permute.xlu0 %2070
        %2072 = vrot.lane.b32.xlu0 %v2040, 4
        %v2073 = vpop.permute.xlu0 %2072
        %2074 = vrot.lane.b32.xlu0 %v2042, 4
        %v2075 = vpop.permute.xlu0 %2074
        %2076 = vrot.lane.b32.xlu0 %v2044, 4
        %v2077 = vpop.permute.xlu0 %2076
        %2078 = vrot.lane.b32.xlu0 %v2046, 4
        %v2079 = vpop.permute.xlu0 %2078
        %2080 = vrot.lane.b32.xlu0 %v833, 8
        %v2081 = vpop.permute.xlu0 %2080
        %2082 = vrot.lane.b32.xlu0 %v834, 8
        %v2083 = vpop.permute.xlu0 %2082
        %2084 = vrot.lane.b32.xlu0 %v835, 8
        %v2085 = vpop.permute.xlu0 %2084
        %2086 = vrot.lane.b32.xlu0 %v836, 8
        %v2087 = vpop.permute.xlu0 %2086
        %2088 = vrot.lane.b32.xlu0 %v837, 8
        %v2089 = vpop.permute.xlu0 %2088
        %2090 = vrot.lane.b32.xlu0 %v838, 8
        %v2091 = vpop.permute.xlu0 %2090
        %2092 = vrot.lane.b32.xlu0 %v839, 8
        %v2093 = vpop.permute.xlu0 %2092
        %2094 = vrot.lane.b32.xlu0 %v840, 8
        %v2095 = vpop.permute.xlu0 %2094
        %2096 = vrot.lane.b32.xlu0 %v841, 8
        %v2097 = vpop.permute.xlu0 %2096
        %2098 = vrot.lane.b32.xlu0 %v842, 8
        %v2099 = vpop.permute.xlu0 %2098
        %2100 = vrot.lane.b32.xlu0 %v843, 8
        %v2101 = vpop.permute.xlu0 %2100
        %2102 = vrot.lane.b32.xlu0 %v844, 8
        %v2103 = vpop.permute.xlu0 %2102
        %2104 = vrot.lane.b32.xlu0 %v845, 8
        %v2105 = vpop.permute.xlu0 %2104
        %2106 = vrot.lane.b32.xlu0 %v846, 8
        %v2107 = vpop.permute.xlu0 %2106
        %2108 = vrot.lane.b32.xlu0 %v847, 8
        %v2109 = vpop.permute.xlu0 %2108
        %2110 = vrot.lane.b32.xlu0 %v848, 8
        %v2111 = vpop.permute.xlu0 %2110
        %v2112 = vshrl.u32 %v833, 16
        %v2114 = vshrl.u32 %v834, 16
        %v2116 = vshrl.u32 %v835, 16
        %v2118 = vshrl.u32 %v836, 16
        %v2120 = vshrl.u32 %v837, 16
        %v2122 = vshrl.u32 %v838, 16
        %v2124 = vshrl.u32 %v839, 16
        %v2126 = vshrl.u32 %v840, 16
        %v2128 = vshrl.u32 %v841, 16
        %v2130 = vshrl.u32 %v842, 16
        %v2132 = vshrl.u32 %v843, 16
        %v2134 = vshrl.u32 %v844, 16
        %v2136 = vshrl.u32 %v845, 16
        %v2138 = vshrl.u32 %v846, 16
        %v2140 = vshrl.u32 %v847, 16
        %v2142 = vshrl.u32 %v848, 16
        %2144 = vrot.lane.b32.xlu0 %v2112, 12
        %v2145 = vpop.permute.xlu0 %2144
        %2146 = vrot.lane.b32.xlu0 %v2114, 12
        %v2147 = vpop.permute.xlu0 %2146
        %2148 = vrot.lane.b32.xlu0 %v2116, 12
        %v2149 = vpop.permute.xlu0 %2148
        %2150 = vrot.lane.b32.xlu0 %v2118, 12
        %v2151 = vpop.permute.xlu0 %2150
        %2152 = vrot.lane.b32.xlu0 %v2120, 12
        %v2153 = vpop.permute.xlu0 %2152
        %2154 = vrot.lane.b32.xlu0 %v2122, 12
        %v2155 = vpop.permute.xlu0 %2154
        %2156 = vrot.lane.b32.xlu0 %v2124, 12
        %v2157 = vpop.permute.xlu0 %2156
        %2158 = vrot.lane.b32.xlu0 %v2126, 12
        %v2159 = vpop.permute.xlu0 %2158
        %2160 = vrot.lane.b32.xlu0 %v2128, 12
        %v2161 = vpop.permute.xlu0 %2160
        %2162 = vrot.lane.b32.xlu0 %v2130, 12
        %v2163 = vpop.permute.xlu0 %2162
        %2164 = vrot.lane.b32.xlu0 %v2132, 12
        %v2165 = vpop.permute.xlu0 %2164
        %2166 = vrot.lane.b32.xlu0 %v2134, 12
        %v2167 = vpop.permute.xlu0 %2166
        %2168 = vrot.lane.b32.xlu0 %v2136, 12
        %v2169 = vpop.permute.xlu0 %2168
        %2170 = vrot.lane.b32.xlu0 %v2138, 12
        %v2171 = vpop.permute.xlu0 %2170
        %2172 = vrot.lane.b32.xlu0 %v2140, 12
        %v2173 = vpop.permute.xlu0 %2172
        %2174 = vrot.lane.b32.xlu0 %v2142, 12
        %v2175 = vpop.permute.xlu0 %2174
        %v2177 = vsel %vm1073, %v448, %v2049
        %v2179 = vsel %vm1073, %v449, %v2051
        %v2181 = vsel %vm1073, %v450, %v2053
        %v2183 = vsel %vm1073, %v451, %v2055
        %v2185 = vsel %vm1073, %v452, %v2057
        %v2187 = vsel %vm1073, %v453, %v2059
        %v2189 = vsel %vm1073, %v454, %v2061
        %v2191 = vsel %vm1073, %v455, %v2063
        %v2193 = vsel %vm1073, %v456, %v2065
        %v2195 = vsel %vm1073, %v457, %v2067
        %v2197 = vsel %vm1073, %v458, %v2069
        %v2199 = vsel %vm1073, %v459, %v2071
        %v2201 = vsel %vm1073, %v460, %v2073
        %v2203 = vsel %vm1073, %v461, %v2075
        %v2205 = vsel %vm1073, %v462, %v2077
        %v2207 = vsel %vm1073, %v463, %v2079
        %v2209 = vsel %vm1106, %v2177, %v2081
        %v2211 = vsel %vm1106, %v2179, %v2083
        %v2213 = vsel %vm1106, %v2181, %v2085
        %v2215 = vsel %vm1106, %v2183, %v2087
        %v2217 = vsel %vm1106, %v2185, %v2089
        %v2219 = vsel %vm1106, %v2187, %v2091
        %v2221 = vsel %vm1106, %v2189, %v2093
        %v2223 = vsel %vm1106, %v2191, %v2095
        %v2225 = vsel %vm1106, %v2193, %v2097
        %v2227 = vsel %vm1106, %v2195, %v2099
        %v2229 = vsel %vm1106, %v2197, %v2101
        %v2231 = vsel %vm1106, %v2199, %v2103
        %v2233 = vsel %vm1106, %v2201, %v2105
        %v2235 = vsel %vm1106, %v2203, %v2107
        %v2237 = vsel %vm1106, %v2205, %v2109
        %v2239 = vsel %vm1106, %v2207, %v2111
        %v2241 = vsel %vm1139, %v2209, %v2145
        %v2243 = vsel %vm1139, %v2211, %v2147
        %v2245 = vsel %vm1139, %v2213, %v2149
        %v2247 = vsel %vm1139, %v2215, %v2151
        %v2249 = vsel %vm1139, %v2217, %v2153
        %v2251 = vsel %vm1139, %v2219, %v2155
        %v2253 = vsel %vm1139, %v2221, %v2157
        %v2255 = vsel %vm1139, %v2223, %v2159
        %v2257 = vsel %vm1139, %v2225, %v2161
        %v2259 = vsel %vm1139, %v2227, %v2163
        %v2261 = vsel %vm1139, %v2229, %v2165
        %v2263 = vsel %vm1139, %v2231, %v2167
        %v2265 = vsel %vm1139, %v2233, %v2169
        %v2267 = vsel %vm1139, %v2235, %v2171
        %v2269 = vsel %vm1139, %v2237, %v2173
        %v2271 = vsel %vm1139, %v2239, %v2175
        %v2272 = vshrl.u32 %v1141, 16
        %v2274 = vshll.u32 %v1141, 16
        %v2276 = vrot.slane %v2274, 1
        %v2277 = vor.u32 %v2272, %v2276
        %v2278 = vshll.u32 %v2241, 16
        %v2280 = vrot.slane %v2278, 1
        %v2281 = vsel %vm464, %v2277, %v2280
        %v2282 = vshrl.u32 %v1143, 16
        %v2284 = vshll.u32 %v1143, 16
        %v2286 = vrot.slane %v2284, 1
        %v2287 = vor.u32 %v2282, %v2286
        %v2288 = vshll.u32 %v2243, 16
        %v2290 = vrot.slane %v2288, 1
        %v2291 = vsel %vm464, %v2287, %v2290
        %v2292 = vshrl.u32 %v1145, 16
        %v2294 = vshll.u32 %v1145, 16
        %v2296 = vrot.slane %v2294, 1
        %v2297 = vor.u32 %v2292, %v2296
        %v2298 = vshll.u32 %v2245, 16
        %v2300 = vrot.slane %v2298, 1
        %v2301 = vsel %vm464, %v2297, %v2300
        %v2302 = vshrl.u32 %v1147, 16
        %v2304 = vshll.u32 %v1147, 16
        %v2306 = vrot.slane %v2304, 1
        %v2307 = vor.u32 %v2302, %v2306
        %v2308 = vshll.u32 %v2247, 16
        %v2310 = vrot.slane %v2308, 1
        %v2311 = vsel %vm464, %v2307, %v2310
        %v2312 = vshrl.u32 %v1149, 16
        %v2314 = vshll.u32 %v1149, 16
        %v2316 = vrot.slane %v2314, 1
        %v2317 = vor.u32 %v2312, %v2316
        %v2318 = vshll.u32 %v2249, 16
        %v2320 = vrot.slane %v2318, 1
        %v2321 = vsel %vm464, %v2317, %v2320
        %v2322 = vshrl.u32 %v1151, 16
        %v2324 = vshll.u32 %v1151, 16
        %v2326 = vrot.slane %v2324, 1
        %v2327 = vor.u32 %v2322, %v2326
        %v2328 = vshll.u32 %v2251, 16
        %v2330 = vrot.slane %v2328, 1
        %v2331 = vsel %vm464, %v2327, %v2330
        %v2332 = vshrl.u32 %v1153, 16
        %v2334 = vshll.u32 %v1153, 16
        %v2336 = vrot.slane %v2334, 1
        %v2337 = vor.u32 %v2332, %v2336
        %v2338 = vshll.u32 %v2253, 16
        %v2340 = vrot.slane %v2338, 1
        %v2341 = vsel %vm464, %v2337, %v2340
        %v2342 = vshrl.u32 %v1155, 16
        %v2344 = vshll.u32 %v1155, 16
        %v2346 = vrot.slane %v2344, 1
        %v2347 = vor.u32 %v2342, %v2346
        %v2348 = vshll.u32 %v2255, 16
        %v2350 = vrot.slane %v2348, 1
        %v2351 = vsel %vm464, %v2347, %v2350
        %v2352 = vshrl.u32 %v1157, 16
        %v2354 = vshll.u32 %v1157, 16
        %v2356 = vrot.slane %v2354, 1
        %v2357 = vor.u32 %v2352, %v2356
        %v2358 = vshll.u32 %v2257, 16
        %v2360 = vrot.slane %v2358, 1
        %v2361 = vsel %vm464, %v2357, %v2360
        %v2362 = vshrl.u32 %v1159, 16
        %v2364 = vshll.u32 %v1159, 16
        %v2366 = vrot.slane %v2364, 1
        %v2367 = vor.u32 %v2362, %v2366
        %v2368 = vshll.u32 %v2259, 16
        %v2370 = vrot.slane %v2368, 1
        %v2371 = vsel %vm464, %v2367, %v2370
        %v2372 = vshrl.u32 %v1161, 16
        %v2374 = vshll.u32 %v1161, 16
        %v2376 = vrot.slane %v2374, 1
        %v2377 = vor.u32 %v2372, %v2376
        %v2378 = vshll.u32 %v2261, 16
        %v2380 = vrot.slane %v2378, 1
        %v2381 = vsel %vm464, %v2377, %v2380
        %v2382 = vshrl.u32 %v1163, 16
        %v2384 = vshll.u32 %v1163, 16
        %v2386 = vrot.slane %v2384, 1
        %v2387 = vor.u32 %v2382, %v2386
        %v2388 = vshll.u32 %v2263, 16
        %v2390 = vrot.slane %v2388, 1
        %v2391 = vsel %vm464, %v2387, %v2390
        %v2392 = vshrl.u32 %v1165, 16
        %v2394 = vshll.u32 %v1165, 16
        %v2396 = vrot.slane %v2394, 1
        %v2397 = vor.u32 %v2392, %v2396
        %v2398 = vshll.u32 %v2265, 16
        %v2400 = vrot.slane %v2398, 1
        %v2401 = vsel %vm464, %v2397, %v2400
        %v2402 = vshrl.u32 %v1167, 16
        %v2404 = vshll.u32 %v1167, 16
        %v2406 = vrot.slane %v2404, 1
        %v2407 = vor.u32 %v2402, %v2406
        %v2408 = vshll.u32 %v2267, 16
        %v2410 = vrot.slane %v2408, 1
        %v2411 = vsel %vm464, %v2407, %v2410
        %v2412 = vshrl.u32 %v1169, 16
        %v2414 = vshll.u32 %v1169, 16
        %v2416 = vrot.slane %v2414, 1
        %v2417 = vor.u32 %v2412, %v2416
        %v2418 = vshll.u32 %v2269, 16
        %v2420 = vrot.slane %v2418, 1
        %v2421 = vsel %vm464, %v2417, %v2420
        %v2422 = vshrl.u32 %v1171, 16
        %v2424 = vshll.u32 %v1171, 16
        %v2426 = vrot.slane %v2424, 1
        %v2427 = vor.u32 %v2422, %v2426
        %v2428 = vshll.u32 %v2271, 16
        %v2430 = vrot.slane %v2428, 1
        %v2431 = vsel %vm464, %v2427, %v2430
        %s2432 = scalar_lea.vmem %s229, 8
        %v2433 = vld [vmem:[%s2432] sm:$0xf]
        %v2434 = vld [vmem:[%s2432 + $0x4] sm:$0xf]
        %v2437 = vunpack.c.l.b16 %v2433
        %v2438 = vunpack.c.l.b16 %v2434
        %v2439 = vpack.c.b16 %v2438, %v2437
        %v2442 = vsel %vm1180, %v2281, 0
        %v2445 = vsel %vm1180, %v2291, 0
        %v2448 = vsel %vm1180, %v2301, 0
        %v2451 = vsel %vm1180, %v2311, 0
        %v2454 = vsel %vm1180, %v2321, 0
        %v2457 = vsel %vm1180, %v2331, 0
        %v2460 = vsel %vm1180, %v2341, 0
        %v2463 = vsel %vm1180, %v2351, 0
        %v2466 = vsel %vm1180, %v2361, 0
        %v2469 = vsel %vm1180, %v2371, 0
        %v2472 = vsel %vm1180, %v2381, 0
        %v2475 = vsel %vm1180, %v2391, 0
        %v2478 = vsel %vm1180, %v2401, 0
        %v2481 = vsel %vm1180, %v2411, 0
        %v2484 = vsel %vm1180, %v2421, 0
        %v2487 = vsel %vm1180, %v2431, 0
        %2489 = vmatprep.subr.bf16.mxu0 0
        %2490 = vmatpush1.bf16.msra.mxu0 %v2439
        %2491 = vmatprep.subr.bf16.mxu0 0
        %2492 = vmatpush1.bf16.msra.mxu0 0
        %2493 = vmatprep.subr.bf16.mxu0 0
        %2494 = vmatpush1.bf16.msra.mxu0 0
        %2495 = vmatprep.subr.bf16.mxu0 0
        %2496 = vmatpush1.bf16.msra.mxu0 0
        %2497 = vmatprep.subr.bf16.mxu0 0
        %2498 = vmatpush1.bf16.msra.mxu0 0
        %2499 = vmatprep.subr.bf16.mxu0 0
        %2500 = vmatpush1.bf16.msra.mxu0 0
        %2501 = vmatprep.subr.bf16.mxu0 0
        %2502 = vmatpush1.bf16.msra.mxu0 0
        %2503 = vmatprep.subr.bf16.mxu0 0
        %2504 = vmatpush1.bf16.msra.mxu0 0
        %2505 = vmatprep.subr.bf16.mxu0 0
        %2506 = vmatpush1.bf16.msra.mxu0 0
        %2507 = vmatprep.subr.bf16.mxu0 0
        %2508 = vmatpush1.bf16.msra.mxu0 0
        %2509 = vmatprep.subr.bf16.mxu0 0
        %2510 = vmatpush1.bf16.msra.mxu0 0
        %2511 = vmatprep.subr.bf16.mxu0 0
        %2512 = vmatpush1.bf16.msra.mxu0 0
        %2513 = vmatprep.subr.bf16.mxu0 0
        %2514 = vmatpush1.bf16.msra.mxu0 0
        %2515 = vmatprep.subr.bf16.mxu0 0
        %2516 = vmatpush1.bf16.msra.mxu0 0
        %2517 = vmatprep.subr.bf16.mxu0 0
        %2518 = vmatpush1.bf16.msra.mxu0 0
        %2519 = vmatprep.subr.bf16.mxu0 0
        %2520 = vmatpush1.bf16.msra.mxu0 0
        %2521 = vmatprep.mubr.bf16.mxu0 0
        %2522 = vmatmul.mubr.bf16.gmra.mrb[0].mxu0 %v2442
        %v2523 = vpop.f32.mrb[0].mxu0
        %v2524 = vadd.f32 0.0, %v2523
        %v2525 = vpop.f32.mrb[0].mxu0
        %v2526 = vpop.f32.mrb[0].mxu0
        %v2527 = vadd.f32 0.0, %v2526
        %v2528 = vpop.f32.mrb[0].mxu0
        %2529 = vmatprep.mubr.bf16.mxu0 0
        %2530 = vmatmul.mubr.bf16.gmra.mrb[0].mxu0 %v2445
        %v2531 = vpop.f32.mrb[0].mxu0
        %v2532 = vadd.f32 0.0, %v2531
        %v2533 = vpop.f32.mrb[0].mxu0
        %v2534 = vpop.f32.mrb[0].mxu0
        %v2535 = vadd.f32 0.0, %v2534
        %v2536 = vpop.f32.mrb[0].mxu0
        %2537 = vmatprep.mubr.bf16.mxu0 0
        %2538 = vmatmul.mubr.bf16.gmra.mrb[0].mxu0 %v2448
        %v2539 = vpop.f32.mrb[0].mxu0
        %v2540 = vadd.f32 0.0, %v2539
        %v2541 = vpop.f32.mrb[0].mxu0
        %v2542 = vpop.f32.mrb[0].mxu0
        %v2543 = vadd.f32 0.0, %v2542
        %v2544 = vpop.f32.mrb[0].mxu0
        %2545 = vmatprep.mubr.bf16.mxu0 0
        %2546 = vmatmul.mubr.bf16.gmra.mrb[0].mxu0 %v2451
        %v2547 = vpop.f32.mrb[0].mxu0
        %v2548 = vadd.f32 0.0, %v2547
        %v2549 = vpop.f32.mrb[0].mxu0
        %v2550 = vpop.f32.mrb[0].mxu0
        %v2551 = vadd.f32 0.0, %v2550
        %v2552 = vpop.f32.mrb[0].mxu0
        %2553 = vmatprep.mubr.bf16.mxu0 0
        %2554 = vmatmul.mubr.bf16.gmra.mrb[0].mxu0 %v2454
        %v2555 = vpop.f32.mrb[0].mxu0
        %v2556 = vadd.f32 0.0, %v2555
        %v2557 = vpop.f32.mrb[0].mxu0
        %v2558 = vpop.f32.mrb[0].mxu0
        %v2559 = vadd.f32 0.0, %v2558
        %v2560 = vpop.f32.mrb[0].mxu0
        %2561 = vmatprep.mubr.bf16.mxu0 0
        %2562 = vmatmul.mubr.bf16.gmra.mrb[0].mxu0 %v2457
        %v2563 = vpop.f32.mrb[0].mxu0
        %v2564 = vadd.f32 0.0, %v2563
        %v2565 = vpop.f32.mrb[0].mxu0
        %v2566 = vpop.f32.mrb[0].mxu0
        %v2567 = vadd.f32 0.0, %v2566
        %v2568 = vpop.f32.mrb[0].mxu0
        %2569 = vmatprep.mubr.bf16.mxu0 0
        %2570 = vmatmul.mubr.bf16.gmra.mrb[0].mxu0 %v2460
        %v2571 = vpop.f32.mrb[0].mxu0
        %v2572 = vadd.f32 0.0, %v2571
        %v2573 = vpop.f32.mrb[0].mxu0
        %v2574 = vpop.f32.mrb[0].mxu0
        %v2575 = vadd.f32 0.0, %v2574
        %v2576 = vpop.f32.mrb[0].mxu0
        %2577 = vmatprep.mubr.bf16.mxu0 0
        %2578 = vmatmul.mubr.bf16.gmra.mrb[0].mxu0 %v2463
        %v2579 = vpop.f32.mrb[0].mxu0
        %v2580 = vadd.f32 0.0, %v2579
        %v2581 = vpop.f32.mrb[0].mxu0
        %v2582 = vpop.f32.mrb[0].mxu0
        %v2583 = vadd.f32 0.0, %v2582
        %v2584 = vpop.f32.mrb[0].mxu0
        %2585 = vmatprep.mubr.bf16.mxu0 0
        %2586 = vmatmul.mubr.bf16.gmra.mrb[0].mxu0 %v2466
        %v2587 = vpop.f32.mrb[0].mxu0
        %v2588 = vadd.f32 0.0, %v2587
        %v2589 = vpop.f32.mrb[0].mxu0
        %v2590 = vpop.f32.mrb[0].mxu0
        %v2591 = vadd.f32 0.0, %v2590
        %v2592 = vpop.f32.mrb[0].mxu0
        %2593 = vmatprep.mubr.bf16.mxu0 0
        %2594 = vmatmul.mubr.bf16.gmra.mrb[0].mxu0 %v2469
        %v2595 = vpop.f32.mrb[0].mxu0
        %v2596 = vadd.f32 0.0, %v2595
        %v2597 = vpop.f32.mrb[0].mxu0
        %v2598 = vpop.f32.mrb[0].mxu0
        %v2599 = vadd.f32 0.0, %v2598
        %v2600 = vpop.f32.mrb[0].mxu0
        %2601 = vmatprep.mubr.bf16.mxu0 0
        %2602 = vmatmul.mubr.bf16.gmra.mrb[0].mxu0 %v2472
        %v2603 = vpop.f32.mrb[0].mxu0
        %v2604 = vadd.f32 0.0, %v2603
        %v2605 = vpop.f32.mrb[0].mxu0
        %v2606 = vpop.f32.mrb[0].mxu0
        %v2607 = vadd.f32 0.0, %v2606
        %v2608 = vpop.f32.mrb[0].mxu0
        %2609 = vmatprep.mubr.bf16.mxu0 0
        %2610 = vmatmul.mubr.bf16.gmra.mrb[0].mxu0 %v2475
        %v2611 = vpop.f32.mrb[0].mxu0
        %v2612 = vadd.f32 0.0, %v2611
        %v2613 = vpop.f32.mrb[0].mxu0
        %v2614 = vpop.f32.mrb[0].mxu0
        %v2615 = vadd.f32 0.0, %v2614
        %v2616 = vpop.f32.mrb[0].mxu0
        %2617 = vmatprep.mubr.bf16.mxu0 0
        %2618 = vmatmul.mubr.bf16.gmra.mrb[0].mxu0 %v2478
        %v2619 = vpop.f32.mrb[0].mxu0
        %v2620 = vadd.f32 0.0, %v2619
        %v2621 = vpop.f32.mrb[0].mxu0
        %v2622 = vpop.f32.mrb[0].mxu0
        %v2623 = vadd.f32 0.0, %v2622
        %v2624 = vpop.f32.mrb[0].mxu0
        %2625 = vmatprep.mubr.bf16.mxu0 0
        %2626 = vmatmul.mubr.bf16.gmra.mrb[0].mxu0 %v2481
        %v2627 = vpop.f32.mrb[0].mxu0
        %v2628 = vadd.f32 0.0, %v2627
        %v2629 = vpop.f32.mrb[0].mxu0
        %v2630 = vpop.f32.mrb[0].mxu0
        %v2631 = vadd.f32 0.0, %v2630
        %v2632 = vpop.f32.mrb[0].mxu0
        %2633 = vmatprep.mubr.bf16.mxu0 0
        %2634 = vmatmul.mubr.bf16.gmra.mrb[0].mxu0 %v2484
        %v2635 = vpop.f32.mrb[0].mxu0
        %v2636 = vadd.f32 0.0, %v2635
        %v2637 = vpop.f32.mrb[0].mxu0
        %v2638 = vpop.f32.mrb[0].mxu0
        %v2639 = vadd.f32 0.0, %v2638
        %v2640 = vpop.f32.mrb[0].mxu0
        %2641 = vmatprep.mubr.bf16.mxu0 0
        %2642 = vmatmul.mubr.bf16.gmra.mrb[0].mxu0 %v2487
        %v2643 = vpop.f32.mrb[0].mxu0
        %v2644 = vadd.f32 0.0, %v2643
        %v2645 = vpop.f32.mrb[0].mxu0
        %v2646 = vpop.f32.mrb[0].mxu0
        %v2647 = vadd.f32 0.0, %v2646
        %v2648 = vpop.f32.mrb[0].mxu0
        %2649 = vdwg.mxu0
        %v2666 = vrot.slane %v2532, 7
        %v2667 = vsel %vm1391, %v2666, %v2524
        %v2668 = vrot.slane %v2540, 6
        %v2669 = vsel %vm1394, %v2668, %v2667
        %v2670 = vrot.slane %v2548, 5
        %v2671 = vsel %vm1397, %v2670, %v2669
        %v2672 = vrot.slane %v2556, 4
        %v2673 = vsel %vm1400, %v2672, %v2671
        %v2674 = vrot.slane %v2564, 3
        %v2675 = vsel %vm1403, %v2674, %v2673
        %v2676 = vrot.slane %v2572, 2
        %v2677 = vsel %vm1406, %v2676, %v2675
        %v2678 = vrot.slane %v2580, 1
        %v2679 = vsel %vm1409, %v2678, %v2677
        %v2680 = vrot.slane %v2596, 7
        %v2681 = vsel %vm1391, %v2680, %v2588
        %v2682 = vrot.slane %v2604, 6
        %v2683 = vsel %vm1394, %v2682, %v2681
        %v2684 = vrot.slane %v2612, 5
        %v2685 = vsel %vm1397, %v2684, %v2683
        %v2686 = vrot.slane %v2620, 4
        %v2687 = vsel %vm1400, %v2686, %v2685
        %v2688 = vrot.slane %v2628, 3
        %v2689 = vsel %vm1403, %v2688, %v2687
        %v2690 = vrot.slane %v2636, 2
        %v2691 = vsel %vm1406, %v2690, %v2689
        %v2692 = vrot.slane %v2644, 1
        %v2693 = vsel %vm1409, %v2692, %v2691
        %v2696 = vrot.slane %v2524, 1
        %v2697 = vsel %vm1391, %v2532, %v2696
        %v2698 = vrot.slane %v2540, 7
        %v2699 = vsel %vm1394, %v2698, %v2697
        %v2700 = vrot.slane %v2548, 6
        %v2701 = vsel %vm1397, %v2700, %v2699
        %v2702 = vrot.slane %v2556, 5
        %v2703 = vsel %vm1400, %v2702, %v2701
        %v2704 = vrot.slane %v2564, 4
        %v2705 = vsel %vm1403, %v2704, %v2703
        %v2706 = vrot.slane %v2572, 3
        %v2707 = vsel %vm1406, %v2706, %v2705
        %v2708 = vrot.slane %v2580, 2
        %v2709 = vsel %vm1409, %v2708, %v2707
        %v2710 = vrot.slane %v2588, 1
        %v2711 = vsel %vm1391, %v2596, %v2710
        %v2712 = vrot.slane %v2604, 7
        %v2713 = vsel %vm1394, %v2712, %v2711
        %v2714 = vrot.slane %v2612, 6
        %v2715 = vsel %vm1397, %v2714, %v2713
        %v2716 = vrot.slane %v2620, 5
        %v2717 = vsel %vm1400, %v2716, %v2715
        %v2718 = vrot.slane %v2628, 4
        %v2719 = vsel %vm1403, %v2718, %v2717
        %v2720 = vrot.slane %v2636, 3
        %v2721 = vsel %vm1406, %v2720, %v2719
        %v2722 = vrot.slane %v2644, 2
        %v2723 = vsel %vm1409, %v2722, %v2721
        %2724 = vrot.lane.b32.xlu0 %v2709, 8
        %v2725 = vpop.permute.xlu0 %2724
        %2726 = vrot.lane.b32.xlu0 %v2723, 8
        %v2727 = vpop.permute.xlu0 %2726
        %v2730 = vrot.slane %v2524, 2
        %v2731 = vrot.slane %v2532, 1
        %v2732 = vsel %vm1391, %v2731, %v2730
        %v2733 = vsel %vm1394, %v2540, %v2732
        %v2734 = vrot.slane %v2548, 7
        %v2735 = vsel %vm1397, %v2734, %v2733
        %v2736 = vrot.slane %v2556, 6
        %v2737 = vsel %vm1400, %v2736, %v2735
        %v2738 = vrot.slane %v2564, 5
        %v2739 = vsel %vm1403, %v2738, %v2737
        %v2740 = vrot.slane %v2572, 4
        %v2741 = vsel %vm1406, %v2740, %v2739
        %v2742 = vrot.slane %v2580, 3
        %v2743 = vsel %vm1409, %v2742, %v2741
        %v2744 = vrot.slane %v2588, 2
        %v2745 = vrot.slane %v2596, 1
        %v2746 = vsel %vm1391, %v2745, %v2744
        %v2747 = vsel %vm1394, %v2604, %v2746
        %v2748 = vrot.slane %v2612, 7
        %v2749 = vsel %vm1397, %v2748, %v2747
        %v2750 = vrot.slane %v2620, 6
        %v2751 = vsel %vm1400, %v2750, %v2749
        %v2752 = vrot.slane %v2628, 5
        %v2753 = vsel %vm1403, %v2752, %v2751
        %v2754 = vrot.slane %v2636, 4
        %v2755 = vsel %vm1406, %v2754, %v2753
        %v2756 = vrot.slane %v2644, 3
        %v2757 = vsel %vm1409, %v2756, %v2755
        %2758 = vrot.lane.b32.xlu0 %v2743, 16
        %v2759 = vpop.permute.xlu0 %2758
        %2760 = vrot.lane.b32.xlu0 %v2757, 16
        %v2761 = vpop.permute.xlu0 %2760
        %v2764 = vrot.slane %v2524, 3
        %v2765 = vrot.slane %v2532, 2
        %v2766 = vsel %vm1391, %v2765, %v2764
        %v2767 = vrot.slane %v2540, 1
        %v2768 = vsel %vm1394, %v2767, %v2766
        %v2769 = vsel %vm1397, %v2548, %v2768
        %v2770 = vrot.slane %v2556, 7
        %v2771 = vsel %vm1400, %v2770, %v2769
        %v2772 = vrot.slane %v2564, 6
        %v2773 = vsel %vm1403, %v2772, %v2771
        %v2774 = vrot.slane %v2572, 5
        %v2775 = vsel %vm1406, %v2774, %v2773
        %v2776 = vrot.slane %v2580, 4
        %v2777 = vsel %vm1409, %v2776, %v2775
        %v2778 = vrot.slane %v2588, 3
        %v2779 = vrot.slane %v2596, 2
        %v2780 = vsel %vm1391, %v2779, %v2778
        %v2781 = vrot.slane %v2604, 1
        %v2782 = vsel %vm1394, %v2781, %v2780
        %v2783 = vsel %vm1397, %v2612, %v2782
        %v2784 = vrot.slane %v2620, 7
        %v2785 = vsel %vm1400, %v2784, %v2783
        %v2786 = vrot.slane %v2628, 6
        %v2787 = vsel %vm1403, %v2786, %v2785
        %v2788 = vrot.slane %v2636, 5
        %v2789 = vsel %vm1406, %v2788, %v2787
        %v2790 = vrot.slane %v2644, 4
        %v2791 = vsel %vm1409, %v2790, %v2789
        %2792 = vrot.lane.b32.xlu0 %v2777, 24
        %v2793 = vpop.permute.xlu0 %2792
        %2794 = vrot.lane.b32.xlu0 %v2791, 24
        %v2795 = vpop.permute.xlu0 %2794
        %v2798 = vrot.slane %v2524, 4
        %v2799 = vrot.slane %v2532, 3
        %v2800 = vsel %vm1391, %v2799, %v2798
        %v2801 = vrot.slane %v2540, 2
        %v2802 = vsel %vm1394, %v2801, %v2800
        %v2803 = vrot.slane %v2548, 1
        %v2804 = vsel %vm1397, %v2803, %v2802
        %v2805 = vsel %vm1400, %v2556, %v2804
        %v2806 = vrot.slane %v2564, 7
        %v2807 = vsel %vm1403, %v2806, %v2805
        %v2808 = vrot.slane %v2572, 6
        %v2809 = vsel %vm1406, %v2808, %v2807
        %v2810 = vrot.slane %v2580, 5
        %v2811 = vsel %vm1409, %v2810, %v2809
        %v2812 = vrot.slane %v2588, 4
        %v2813 = vrot.slane %v2596, 3
        %v2814 = vsel %vm1391, %v2813, %v2812
        %v2815 = vrot.slane %v2604, 2
        %v2816 = vsel %vm1394, %v2815, %v2814
        %v2817 = vrot.slane %v2612, 1
        %v2818 = vsel %vm1397, %v2817, %v2816
        %v2819 = vsel %vm1400, %v2620, %v2818
        %v2820 = vrot.slane %v2628, 7
        %v2821 = vsel %vm1403, %v2820, %v2819
        %v2822 = vrot.slane %v2636, 6
        %v2823 = vsel %vm1406, %v2822, %v2821
        %v2824 = vrot.slane %v2644, 5
        %v2825 = vsel %vm1409, %v2824, %v2823
        %2826 = vrot.lane.b32.xlu0 %v2811, 32
        %v2827 = vpop.permute.xlu0 %2826
        %2828 = vrot.lane.b32.xlu0 %v2825, 32
        %v2829 = vpop.permute.xlu0 %2828
        %v2832 = vrot.slane %v2524, 5
        %v2833 = vrot.slane %v2532, 4
        %v2834 = vsel %vm1391, %v2833, %v2832
        %v2835 = vrot.slane %v2540, 3
        %v2836 = vsel %vm1394, %v2835, %v2834
        %v2837 = vrot.slane %v2548, 2
        %v2838 = vsel %vm1397, %v2837, %v2836
        %v2839 = vrot.slane %v2556, 1
        %v2840 = vsel %vm1400, %v2839, %v2838
        %v2841 = vsel %vm1403, %v2564, %v2840
        %v2842 = vrot.slane %v2572, 7
        %v2843 = vsel %vm1406, %v2842, %v2841
        %v2844 = vrot.slane %v2580, 6
        %v2845 = vsel %vm1409, %v2844, %v2843
        %v2846 = vrot.slane %v2588, 5
        %v2847 = vrot.slane %v2596, 4
        %v2848 = vsel %vm1391, %v2847, %v2846
        %v2849 = vrot.slane %v2604, 3
        %v2850 = vsel %vm1394, %v2849, %v2848
        %v2851 = vrot.slane %v2612, 2
        %v2852 = vsel %vm1397, %v2851, %v2850
        %v2853 = vrot.slane %v2620, 1
        %v2854 = vsel %vm1400, %v2853, %v2852
        %v2855 = vsel %vm1403, %v2628, %v2854
        %v2856 = vrot.slane %v2636, 7
        %v2857 = vsel %vm1406, %v2856, %v2855
        %v2858 = vrot.slane %v2644, 6
        %v2859 = vsel %vm1409, %v2858, %v2857
        %2860 = vrot.lane.b32.xlu0 %v2845, 40
        %v2861 = vpop.permute.xlu0 %2860
        %2862 = vrot.lane.b32.xlu0 %v2859, 40
        %v2863 = vpop.permute.xlu0 %2862
        %v2866 = vrot.slane %v2524, 6
        %v2867 = vrot.slane %v2532, 5
        %v2868 = vsel %vm1391, %v2867, %v2866
        %v2869 = vrot.slane %v2540, 4
        %v2870 = vsel %vm1394, %v2869, %v2868
        %v2871 = vrot.slane %v2548, 3
        %v2872 = vsel %vm1397, %v2871, %v2870
        %v2873 = vrot.slane %v2556, 2
        %v2874 = vsel %vm1400, %v2873, %v2872
        %v2875 = vrot.slane %v2564, 1
        %v2876 = vsel %vm1403, %v2875, %v2874
        %v2877 = vsel %vm1406, %v2572, %v2876
        %v2878 = vrot.slane %v2580, 7
        %v2879 = vsel %vm1409, %v2878, %v2877
        %v2880 = vrot.slane %v2588, 6
        %v2881 = vrot.slane %v2596, 5
        %v2882 = vsel %vm1391, %v2881, %v2880
        %v2883 = vrot.slane %v2604, 4
        %v2884 = vsel %vm1394, %v2883, %v2882
        %v2885 = vrot.slane %v2612, 3
        %v2886 = vsel %vm1397, %v2885, %v2884
        %v2887 = vrot.slane %v2620, 2
        %v2888 = vsel %vm1400, %v2887, %v2886
        %v2889 = vrot.slane %v2628, 1
        %v2890 = vsel %vm1403, %v2889, %v2888
        %v2891 = vsel %vm1406, %v2636, %v2890
        %v2892 = vrot.slane %v2644, 7
        %v2893 = vsel %vm1409, %v2892, %v2891
        %2894 = vrot.lane.b32.xlu0 %v2879, 48
        %v2895 = vpop.permute.xlu0 %2894
        %2896 = vrot.lane.b32.xlu0 %v2893, 48
        %v2897 = vpop.permute.xlu0 %2896
        %v2900 = vrot.slane %v2524, 7
        %v2901 = vrot.slane %v2532, 6
        %v2902 = vsel %vm1391, %v2901, %v2900
        %v2903 = vrot.slane %v2540, 5
        %v2904 = vsel %vm1394, %v2903, %v2902
        %v2905 = vrot.slane %v2548, 4
        %v2906 = vsel %vm1397, %v2905, %v2904
        %v2907 = vrot.slane %v2556, 3
        %v2908 = vsel %vm1400, %v2907, %v2906
        %v2909 = vrot.slane %v2564, 2
        %v2910 = vsel %vm1403, %v2909, %v2908
        %v2911 = vrot.slane %v2572, 1
        %v2912 = vsel %vm1406, %v2911, %v2910
        %v2913 = vsel %vm1409, %v2580, %v2912
        %v2914 = vrot.slane %v2588, 7
        %v2915 = vrot.slane %v2596, 6
        %v2916 = vsel %vm1391, %v2915, %v2914
        %v2917 = vrot.slane %v2604, 5
        %v2918 = vsel %vm1394, %v2917, %v2916
        %v2919 = vrot.slane %v2612, 4
        %v2920 = vsel %vm1397, %v2919, %v2918
        %v2921 = vrot.slane %v2620, 3
        %v2922 = vsel %vm1400, %v2921, %v2920
        %v2923 = vrot.slane %v2628, 2
        %v2924 = vsel %vm1403, %v2923, %v2922
        %v2925 = vrot.slane %v2636, 1
        %v2926 = vsel %vm1406, %v2925, %v2924
        %v2927 = vsel %vm1409, %v2644, %v2926
        %2928 = vrot.lane.b32.xlu0 %v2913, 56
        %v2929 = vpop.permute.xlu0 %2928
        %2930 = vrot.lane.b32.xlu0 %v2927, 56
        %v2931 = vpop.permute.xlu0 %2930
        %v2950 = vrot.slane %v2535, 7
        %v2951 = vsel %vm1391, %v2950, %v2527
        %v2952 = vrot.slane %v2543, 6
        %v2953 = vsel %vm1394, %v2952, %v2951
        %v2954 = vrot.slane %v2551, 5
        %v2955 = vsel %vm1397, %v2954, %v2953
        %v2956 = vrot.slane %v2559, 4
        %v2957 = vsel %vm1400, %v2956, %v2955
        %v2958 = vrot.slane %v2567, 3
        %v2959 = vsel %vm1403, %v2958, %v2957
        %v2960 = vrot.slane %v2575, 2
        %v2961 = vsel %vm1406, %v2960, %v2959
        %v2962 = vrot.slane %v2583, 1
        %v2963 = vsel %vm1409, %v2962, %v2961
        %v2964 = vrot.slane %v2599, 7
        %v2965 = vsel %vm1391, %v2964, %v2591
        %v2966 = vrot.slane %v2607, 6
        %v2967 = vsel %vm1394, %v2966, %v2965
        %v2968 = vrot.slane %v2615, 5
        %v2969 = vsel %vm1397, %v2968, %v2967
        %v2970 = vrot.slane %v2623, 4
        %v2971 = vsel %vm1400, %v2970, %v2969
        %v2972 = vrot.slane %v2631, 3
        %v2973 = vsel %vm1403, %v2972, %v2971
        %v2974 = vrot.slane %v2639, 2
        %v2975 = vsel %vm1406, %v2974, %v2973
        %v2976 = vrot.slane %v2647, 1
        %v2977 = vsel %vm1409, %v2976, %v2975
        %2978 = vrot.lane.b32.xlu0 %v2963, 64
        %v2979 = vpop.permute.xlu0 %2978
        %2980 = vrot.lane.b32.xlu0 %v2977, 64
        %v2981 = vpop.permute.xlu0 %2980
        %v2984 = vrot.slane %v2527, 1
        %v2985 = vsel %vm1391, %v2535, %v2984
        %v2986 = vrot.slane %v2543, 7
        %v2987 = vsel %vm1394, %v2986, %v2985
        %v2988 = vrot.slane %v2551, 6
        %v2989 = vsel %vm1397, %v2988, %v2987
        %v2990 = vrot.slane %v2559, 5
        %v2991 = vsel %vm1400, %v2990, %v2989
        %v2992 = vrot.slane %v2567, 4
        %v2993 = vsel %vm1403, %v2992, %v2991
        %v2994 = vrot.slane %v2575, 3
        %v2995 = vsel %vm1406, %v2994, %v2993
        %v2996 = vrot.slane %v2583, 2
        %v2997 = vsel %vm1409, %v2996, %v2995
        %v2998 = vrot.slane %v2591, 1
        %v2999 = vsel %vm1391, %v2599, %v2998
        %v3000 = vrot.slane %v2607, 7
        %v3001 = vsel %vm1394, %v3000, %v2999
        %v3002 = vrot.slane %v2615, 6
        %v3003 = vsel %vm1397, %v3002, %v3001
        %v3004 = vrot.slane %v2623, 5
        %v3005 = vsel %vm1400, %v3004, %v3003
        %v3006 = vrot.slane %v2631, 4
        %v3007 = vsel %vm1403, %v3006, %v3005
        %v3008 = vrot.slane %v2639, 3
        %v3009 = vsel %vm1406, %v3008, %v3007
        %v3010 = vrot.slane %v2647, 2
        %v3011 = vsel %vm1409, %v3010, %v3009
        %3012 = vrot.lane.b32.xlu0 %v2997, 72
        %v3013 = vpop.permute.xlu0 %3012
        %3014 = vrot.lane.b32.xlu0 %v3011, 72
        %v3015 = vpop.permute.xlu0 %3014
        %v3018 = vrot.slane %v2527, 2
        %v3019 = vrot.slane %v2535, 1
        %v3020 = vsel %vm1391, %v3019, %v3018
        %v3021 = vsel %vm1394, %v2543, %v3020
        %v3022 = vrot.slane %v2551, 7
        %v3023 = vsel %vm1397, %v3022, %v3021
        %v3024 = vrot.slane %v2559, 6
        %v3025 = vsel %vm1400, %v3024, %v3023
        %v3026 = vrot.slane %v2567, 5
        %v3027 = vsel %vm1403, %v3026, %v3025
        %v3028 = vrot.slane %v2575, 4
        %v3029 = vsel %vm1406, %v3028, %v3027
        %v3030 = vrot.slane %v2583, 3
        %v3031 = vsel %vm1409, %v3030, %v3029
        %v3032 = vrot.slane %v2591, 2
        %v3033 = vrot.slane %v2599, 1
        %v3034 = vsel %vm1391, %v3033, %v3032
        %v3035 = vsel %vm1394, %v2607, %v3034
        %v3036 = vrot.slane %v2615, 7
        %v3037 = vsel %vm1397, %v3036, %v3035
        %v3038 = vrot.slane %v2623, 6
        %v3039 = vsel %vm1400, %v3038, %v3037
        %v3040 = vrot.slane %v2631, 5
        %v3041 = vsel %vm1403, %v3040, %v3039
        %v3042 = vrot.slane %v2639, 4
        %v3043 = vsel %vm1406, %v3042, %v3041
        %v3044 = vrot.slane %v2647, 3
        %v3045 = vsel %vm1409, %v3044, %v3043
        %3046 = vrot.lane.b32.xlu0 %v3031, 80
        %v3047 = vpop.permute.xlu0 %3046
        %3048 = vrot.lane.b32.xlu0 %v3045, 80
        %v3049 = vpop.permute.xlu0 %3048
        %v3052 = vrot.slane %v2527, 3
        %v3053 = vrot.slane %v2535, 2
        %v3054 = vsel %vm1391, %v3053, %v3052
        %v3055 = vrot.slane %v2543, 1
        %v3056 = vsel %vm1394, %v3055, %v3054
        %v3057 = vsel %vm1397, %v2551, %v3056
        %v3058 = vrot.slane %v2559, 7
        %v3059 = vsel %vm1400, %v3058, %v3057
        %v3060 = vrot.slane %v2567, 6
        %v3061 = vsel %vm1403, %v3060, %v3059
        %v3062 = vrot.slane %v2575, 5
        %v3063 = vsel %vm1406, %v3062, %v3061
        %v3064 = vrot.slane %v2583, 4
        %v3065 = vsel %vm1409, %v3064, %v3063
        %v3066 = vrot.slane %v2591, 3
        %v3067 = vrot.slane %v2599, 2
        %v3068 = vsel %vm1391, %v3067, %v3066
        %v3069 = vrot.slane %v2607, 1
        %v3070 = vsel %vm1394, %v3069, %v3068
        %v3071 = vsel %vm1397, %v2615, %v3070
        %v3072 = vrot.slane %v2623, 7
        %v3073 = vsel %vm1400, %v3072, %v3071
        %v3074 = vrot.slane %v2631, 6
        %v3075 = vsel %vm1403, %v3074, %v3073
        %v3076 = vrot.slane %v2639, 5
        %v3077 = vsel %vm1406, %v3076, %v3075
        %v3078 = vrot.slane %v2647, 4
        %v3079 = vsel %vm1409, %v3078, %v3077
        %3080 = vrot.lane.b32.xlu0 %v3065, 88
        %v3081 = vpop.permute.xlu0 %3080
        %3082 = vrot.lane.b32.xlu0 %v3079, 88
        %v3083 = vpop.permute.xlu0 %3082
        %v3086 = vrot.slane %v2527, 4
        %v3087 = vrot.slane %v2535, 3
        %v3088 = vsel %vm1391, %v3087, %v3086
        %v3089 = vrot.slane %v2543, 2
        %v3090 = vsel %vm1394, %v3089, %v3088
        %v3091 = vrot.slane %v2551, 1
        %v3092 = vsel %vm1397, %v3091, %v3090
        %v3093 = vsel %vm1400, %v2559, %v3092
        %v3094 = vrot.slane %v2567, 7
        %v3095 = vsel %vm1403, %v3094, %v3093
        %v3096 = vrot.slane %v2575, 6
        %v3097 = vsel %vm1406, %v3096, %v3095
        %v3098 = vrot.slane %v2583, 5
        %v3099 = vsel %vm1409, %v3098, %v3097
        %v3100 = vrot.slane %v2591, 4
        %v3101 = vrot.slane %v2599, 3
        %v3102 = vsel %vm1391, %v3101, %v3100
        %v3103 = vrot.slane %v2607, 2
        %v3104 = vsel %vm1394, %v3103, %v3102
        %v3105 = vrot.slane %v2615, 1
        %v3106 = vsel %vm1397, %v3105, %v3104
        %v3107 = vsel %vm1400, %v2623, %v3106
        %v3108 = vrot.slane %v2631, 7
        %v3109 = vsel %vm1403, %v3108, %v3107
        %v3110 = vrot.slane %v2639, 6
        %v3111 = vsel %vm1406, %v3110, %v3109
        %v3112 = vrot.slane %v2647, 5
        %v3113 = vsel %vm1409, %v3112, %v3111
        %3114 = vrot.lane.b32.xlu0 %v3099, 96
        %v3115 = vpop.permute.xlu0 %3114
        %3116 = vrot.lane.b32.xlu0 %v3113, 96
        %v3117 = vpop.permute.xlu0 %3116
        %v3120 = vrot.slane %v2527, 5
        %v3121 = vrot.slane %v2535, 4
        %v3122 = vsel %vm1391, %v3121, %v3120
        %v3123 = vrot.slane %v2543, 3
        %v3124 = vsel %vm1394, %v3123, %v3122
        %v3125 = vrot.slane %v2551, 2
        %v3126 = vsel %vm1397, %v3125, %v3124
        %v3127 = vrot.slane %v2559, 1
        %v3128 = vsel %vm1400, %v3127, %v3126
        %v3129 = vsel %vm1403, %v2567, %v3128
        %v3130 = vrot.slane %v2575, 7
        %v3131 = vsel %vm1406, %v3130, %v3129
        %v3132 = vrot.slane %v2583, 6
        %v3133 = vsel %vm1409, %v3132, %v3131
        %v3134 = vrot.slane %v2591, 5
        %v3135 = vrot.slane %v2599, 4
        %v3136 = vsel %vm1391, %v3135, %v3134
        %v3137 = vrot.slane %v2607, 3
        %v3138 = vsel %vm1394, %v3137, %v3136
        %v3139 = vrot.slane %v2615, 2
        %v3140 = vsel %vm1397, %v3139, %v3138
        %v3141 = vrot.slane %v2623, 1
        %v3142 = vsel %vm1400, %v3141, %v3140
        %v3143 = vsel %vm1403, %v2631, %v3142
        %v3144 = vrot.slane %v2639, 7
        %v3145 = vsel %vm1406, %v3144, %v3143
        %v3146 = vrot.slane %v2647, 6
        %v3147 = vsel %vm1409, %v3146, %v3145
        %3148 = vrot.lane.b32.xlu0 %v3133, 104
        %v3149 = vpop.permute.xlu0 %3148
        %3150 = vrot.lane.b32.xlu0 %v3147, 104
        %v3151 = vpop.permute.xlu0 %3150
        %v3154 = vrot.slane %v2527, 6
        %v3155 = vrot.slane %v2535, 5
        %v3156 = vsel %vm1391, %v3155, %v3154
        %v3157 = vrot.slane %v2543, 4
        %v3158 = vsel %vm1394, %v3157, %v3156
        %v3159 = vrot.slane %v2551, 3
        %v3160 = vsel %vm1397, %v3159, %v3158
        %v3161 = vrot.slane %v2559, 2
        %v3162 = vsel %vm1400, %v3161, %v3160
        %v3163 = vrot.slane %v2567, 1
        %v3164 = vsel %vm1403, %v3163, %v3162
        %v3165 = vsel %vm1406, %v2575, %v3164
        %v3166 = vrot.slane %v2583, 7
        %v3167 = vsel %vm1409, %v3166, %v3165
        %v3168 = vrot.slane %v2591, 6
        %v3169 = vrot.slane %v2599, 5
        %v3170 = vsel %vm1391, %v3169, %v3168
        %v3171 = vrot.slane %v2607, 4
        %v3172 = vsel %vm1394, %v3171, %v3170
        %v3173 = vrot.slane %v2615, 3
        %v3174 = vsel %vm1397, %v3173, %v3172
        %v3175 = vrot.slane %v2623, 2
        %v3176 = vsel %vm1400, %v3175, %v3174
        %v3177 = vrot.slane %v2631, 1
        %v3178 = vsel %vm1403, %v3177, %v3176
        %v3179 = vsel %vm1406, %v2639, %v3178
        %v3180 = vrot.slane %v2647, 7
        %v3181 = vsel %vm1409, %v3180, %v3179
        %3182 = vrot.lane.b32.xlu0 %v3167, 112
        %v3183 = vpop.permute.xlu0 %3182
        %3184 = vrot.lane.b32.xlu0 %v3181, 112
        %v3185 = vpop.permute.xlu0 %3184
        %v3188 = vrot.slane %v2527, 7
        %v3189 = vrot.slane %v2535, 6
        %v3190 = vsel %vm1391, %v3189, %v3188
        %v3191 = vrot.slane %v2543, 5
        %v3192 = vsel %vm1394, %v3191, %v3190
        %v3193 = vrot.slane %v2551, 4
        %v3194 = vsel %vm1397, %v3193, %v3192
        %v3195 = vrot.slane %v2559, 3
        %v3196 = vsel %vm1400, %v3195, %v3194
        %v3197 = vrot.slane %v2567, 2
        %v3198 = vsel %vm1403, %v3197, %v3196
        %v3199 = vrot.slane %v2575, 1
        %v3200 = vsel %vm1406, %v3199, %v3198
        %v3201 = vsel %vm1409, %v2583, %v3200
        %v3202 = vrot.slane %v2591, 7
        %v3203 = vrot.slane %v2599, 6
        %v3204 = vsel %vm1391, %v3203, %v3202
        %v3205 = vrot.slane %v2607, 5
        %v3206 = vsel %vm1394, %v3205, %v3204
        %v3207 = vrot.slane %v2615, 4
        %v3208 = vsel %vm1397, %v3207, %v3206
        %v3209 = vrot.slane %v2623, 3
        %v3210 = vsel %vm1400, %v3209, %v3208
        %v3211 = vrot.slane %v2631, 2
        %v3212 = vsel %vm1403, %v3211, %v3210
        %v3213 = vrot.slane %v2639, 1
        %v3214 = vsel %vm1406, %v3213, %v3212
        %v3215 = vsel %vm1409, %v2647, %v3214
        %3216 = vrot.lane.b32.xlu0 %v3201, 120
        %v3217 = vpop.permute.xlu0 %3216
        %3218 = vrot.lane.b32.xlu0 %v3215, 120
        %v3219 = vpop.permute.xlu0 %3218
        %v3222 = vsel %vm1106, %v2679, %v2725
        %v3223 = vsel %vm1106, %v2693, %v2727
        %v3224 = vsel %vm1180, %v3222, %v2759
        %v3225 = vsel %vm1180, %v3223, %v2761
        %v3226 = vsel %vm1957, %v3224, %v2793
        %v3227 = vsel %vm1957, %v3225, %v2795
        %v3228 = vsel %vm1960, %v3226, %v2827
        %v3229 = vsel %vm1960, %v3227, %v2829
        %v3230 = vsel %vm1963, %v3228, %v2861
        %v3231 = vsel %vm1963, %v3229, %v2863
        %v3232 = vsel %vm1966, %v3230, %v2895
        %v3233 = vsel %vm1966, %v3231, %v2897
        %v3234 = vsel %vm1969, %v3232, %v2929
        %v3235 = vsel %vm1969, %v3233, %v2931
        %v3236 = vsel %vm1972, %v3234, %v2979
        %v3237 = vsel %vm1972, %v3235, %v2981
        %v3238 = vsel %vm1975, %v3236, %v3013
        %v3239 = vsel %vm1975, %v3237, %v3015
        %v3240 = vsel %vm1978, %v3238, %v3047
        %v3241 = vsel %vm1978, %v3239, %v3049
        %v3242 = vsel %vm1981, %v3240, %v3081
        %v3243 = vsel %vm1981, %v3241, %v3083
        %v3244 = vsel %vm1984, %v3242, %v3115
        %v3245 = vsel %vm1984, %v3243, %v3117
        %v3246 = vsel %vm1987, %v3244, %v3149
        %v3247 = vsel %vm1987, %v3245, %v3151
        %v3248 = vsel %vm1990, %v3246, %v3183
        %v3249 = vsel %vm1990, %v3247, %v3185
        %v3250 = vsel %vm1993, %v3248, %v3217
        %v3251 = vsel %vm1993, %v3249, %v3219
        %v3252 = vmul.f32 %v3250, %v2000
        %v3253 = vmul.f32 %v3251, %v2000
        %v3254 = vadd.f32 %v3252, %v2008
        %v3255 = vadd.f32 %v3253, %v2008
        %v3256 = vmax.f32 %v3254, 0.0
        %v3257 = vmax.f32 %v3255, 0.0
        %s3258 = scalar_lea.vmem %s219, 16 [#allocation2]
        %3259 = vst [vmem:[%s3258] sm:$0xff] %v3256
        %3260 = vst [vmem:[%s3258 + $0x8] sm:$0xff] %v3257
        %s3261 = sand.u32 %s134, 1
        %s3262 = scalar_lea.sflag [#allocation3], %s3261
        %s3263 = sand.u32 %s134, 1
        %s3264 = smul.addr %s3263, 32
        %s3265 = scalar_lea.vmem [#allocation2], %s3264
        // Predicated region
        $region37: #{tpu_custom_call.1} parent=35 // pred_check
          %p3266 = pneg %p144
        $region38: #{tpu_custom_call.1} parent=35 // pred_check_branch
          %3268 = sbr.rel (%p3266) target = $region40
        $region39: #{tpu_custom_call.1} parent=35 // pred_region
          %s3270 = ssub.s32 512, 512
          %3271 = vsyncadd %s3262, %s3270
          %s3272 = smul.addr %s23, 4
          %s3273 = smul.addr %s22, 8
          %s3274 = sadd.s32 %s3272, %s3273
          %s3275 = smul.addr %s3274, 128
          %s3276 = scalar_lea.hbm %s4, %s3275
          %s3277 = sshll.u32 %s3265, 4
          %s3278 = int_to_ptr.vmem [resolvable:$true] %s3277
          %3283 = dma.vmem_to_hbm [thread:$0]  %s3278, 512, %s3276, %s3262, 128, 128, 8
        $region40: #{tpu_custom_call.1} parent=35 // pred_fallthru
          _
      $region36: #{tpu_custom_call.1} parent=5 // pred_fallthru
        _
      %p3284 = scmp.le.s32.totalorder 2, %s13
      // Predicated region
      $region41: #{tpu_custom_call.1} parent=5 // pred_check
        %p3285 = pneg %p3284
      $region42: #{tpu_custom_call.1} parent=5 // pred_check_branch
        %3287 = sbr.rel (%p3285) target = $region44
      $region43: #{tpu_custom_call.1} parent=5 // pred_region
        %s3288 = ssub.s32 %s13, 2
        // Predicated region
        $region45: #{tpu_custom_call.1} parent=43 // pred_check
          %p3289 = pneg %p150
        $region46: #{tpu_custom_call.1} parent=43 // pred_check_branch
          %3291 = sbr.rel (%p3289) target = $region48
        $region47: #{tpu_custom_call.1} parent=43 // pred_region
          %s3292 = sand.u32 %s135, 1
          %s3293 = scalar_lea.sflag [#allocation3], %s3292
          %s3294 = sand.u32 %s135, 1
          %s3295 = smul.addr %s3294, 32
          %s3296 = scalar_lea.vmem [#allocation2], %s3295
          %3297 = dma.done %s3293, 512
        $region48: #{tpu_custom_call.1} parent=43 // pred_fallthru
          _
      $region44: #{tpu_custom_call.1} parent=5 // pred_fallthru
        _
    $region6: #{tpu_custom_call.1} parent=1 // loop_footer
      %s17 = sadd.s32 1, %s13
    $region7: #{tpu_custom_call.1} parent=1 // loop_footer_branch
      %12 = sbr.rel target = $region3
    $region8: #{tpu_custom_call.1} parent=1 // loop_exit
      _
    %3298 = vsyncpa [#allocation3], 1
    %s3299 = scalar_lea.sflag [#allocation3], 1
    %3300 = vsyncpa %s3299, 1

</llo_original>
